<compile_context>
chip_gen: v7x
topology: tpu7x:2x2x1
jax: 0.10.0
libtpu: 0.0.40
codegen_flags: <defaults>
</compile_context>

<pallas_src>
import functools

import jax
import jax.numpy as jnp
from jax.experimental import pallas as pl
from jax.experimental.pallas import tpu as pltpu

LN_EPS = 1e-5  # PyTorch nn.LayerNorm default

_TM_CANDIDATES = (1024, 768, 512, 384, 256, 128, 64, 32, 16, 8)
_TK_CANDIDATES = (2048, 1024, 512, 256, 128)


# --------------------------------------------------------------------------- kernels

def ffn_sublayer_resident_kernel(x_ref, gamma_ref, beta_ref, w1_ref, b1_ref,
                                 w2_ref, b2_ref, o_ref):
    """Fast path: full W1/W2 resident in VMEM, single pass per row tile."""
    x = x_ref[...].astype(jnp.float32)
    mean = jnp.mean(x, axis=-1, keepdims=True)
    centered = x - mean
    var = jnp.mean(centered * centered, axis=-1, keepdims=True)
    xn = centered * jax.lax.rsqrt(var + LN_EPS)
    xn = (xn * gamma_ref[...] + beta_ref[...]).astype(jnp.bfloat16)

    h = jnp.dot(xn, w1_ref[...], preferred_element_type=jnp.float32) + b1_ref[...]
    h = jnp.maximum(h, 0.0).astype(jnp.bfloat16)
    y = jnp.dot(h, w2_ref[...], preferred_element_type=jnp.float32)

    # dropout == identity (eval mode); residual + second bias in f32.
    o_ref[...] = (x + y + b2_ref[...]).astype(o_ref.dtype)


def ffn_sublayer_streamed_kernel(x_ref, gamma_ref, beta_ref, w1_ref, b1_ref,
                                 w2_ref, b2_ref, o_ref, xn_ref, acc_ref):
    """Fallback: stream W1 column-tiles / W2 row-tiles along a Dff reduction axis."""
    k = pl.program_id(1)
    nk = pl.num_programs(1)

    # --- first Dff tile of this row tile: LayerNorm, cache result (bf16) ---
    @pl.when(k == 0)
    def _():
        x = x_ref[...].astype(jnp.float32)
        mean = jnp.mean(x, axis=-1, keepdims=True)
        centered = x - mean
        var = jnp.mean(centered * centered, axis=-1, keepdims=True)
        xn = centered * jax.lax.rsqrt(var + LN_EPS)
        xn = xn * gamma_ref[...] + beta_ref[...]
        xn_ref[...] = xn.astype(jnp.bfloat16)

    # --- streamed Dff tile: h_k = relu(xn @ W1[:, k] + b1[k]); partial = h_k @ W2[k, :] ---
    h = jnp.dot(xn_ref[...], w1_ref[...],
                preferred_element_type=jnp.float32) + b1_ref[...]
    h = jnp.maximum(h, 0.0)
    partial = jnp.dot(h.astype(jnp.bfloat16), w2_ref[...],
                      preferred_element_type=jnp.float32)

    # Direct write at k==0 (saves one full (tile_m, D) zero-fill + load/add pass).
    @pl.when(k == 0)
    def _():
        acc_ref[...] = partial

    @pl.when(k > 0)
    def _():
        acc_ref[...] += partial

    # --- last Dff tile: second bias, residual (dropout = identity in eval), store ---
    @pl.when(k == nk - 1)
    def _():
        o_ref[...] = (x_ref[...].astype(jnp.float32) + acc_ref[...]
                      + b2_ref[...]).astype(o_ref.dtype)


# --------------------------------------------------------------- tile / VMEM planning

def _vmem_capacity_bytes():
    try:
        return int(pltpu.get_tpu_info().vmem_capacity_bytes)
    except Exception:
        return 64 * 1024 * 1024  # conservative (v7x per-TC) fallback


def _resident_bytes(tm, D, Dff, x_bytes):
    act = 2 * tm * D * x_bytes * 2               # x + out tiles, double-buffered
    weights = 2 * (D * Dff + Dff * D) * 2        # bf16 W1 + W2 (conservative: 2 buffers)
    biases = 2 * (Dff + 3 * D) * 4
    interm = tm * Dff * 6 + tm * D * 8           # h (f32 + bf16) and f32 LN temporaries
    return act + weights + biases + interm


def _streamed_bytes(tm, tk, D, Dff, x_bytes):
    act = 2 * tm * D * x_bytes * 2               # x + out tiles, double-buffered
    weights = 2 * (D * tk + tk * D) * 2          # bf16 W1 col-tile + W2 row-tile
    biases = 2 * (tk + 3 * D) * 4
    scratch = tm * D * (2 + 4)                   # xn bf16 cache + f32 accumulator
    interm = tm * tk * 6                         # h (f32 + bf16)
    return act + weights + biases + scratch + interm


def _choose_tiles(rows, D, Dff, x_bytes, budget):
    m_cands = [c for c in _TM_CANDIDATES if c <= rows and rows % c == 0]
    if rows not in m_cands:
        m_cands.append(rows)                     # full extent is always a legal block
    m_cands = sorted(set(m_cands), reverse=True)

    # 1) Resident-weights fast path: weights DMA'd once for the whole kernel.
    for tm in m_cands:
        if _resident_bytes(tm, D, Dff, x_bytes) <= budget:
            return tm, Dff

    # 2) Streamed weights: maximize tile_m first (arithmetic intensity = tile_m flops
    #    per weight byte), then tile_k (fewer f32-accumulator RMW passes / grid steps).
    k_cands = [c for c in _TK_CANDIDATES if c <= Dff and Dff % c == 0]
    if Dff not in k_cands:
        k_cands.append(Dff)
    k_cands = sorted(set(k_cands), reverse=True)

    for tm in m_cands:
        for tk in k_cands:
            if _streamed_bytes(tm, tk, D, Dff, x_bytes) <= budget:
                return tm, tk
    return m_cands[-1], k_cands[-1]              # let the compiler report OOM if any


# ------------------------------------------------------------------------ entry point

@functools.partial(jax.jit, static_argnames=("tile_m", "tile_k", "vmem_limit"))
def _ffn_sublayer_impl(x, gamma, beta, w1, b1, w2, b2, *, tile_m, tile_k, vmem_limit):
    B, S, D = x.shape
    Dff = w1.shape[1]
    rows = B * S

    x2d = x.reshape(rows, D)
    gamma2d = gamma.reshape(1, D).astype(jnp.float32)
    beta2d = beta.reshape(1, D).astype(jnp.float32)
    b1_2d = b1.reshape(1, Dff).astype(jnp.float32)
    b2_2d = b2.reshape(1, D).astype(jnp.float32)

    if tile_k == Dff:
        # ---------------- resident-weights fast path (1-D grid over row tiles) -------
        out2d = pl.pallas_call(
            ffn_sublayer_resident_kernel,
            out_shape=jax.ShapeDtypeStruct((rows, D), x.dtype),
            grid_spec=pltpu.PrefetchScalarGridSpec(
                num_scalar_prefetch=0,
                grid=(rows // tile_m,),
                in_specs=[
                    pl.BlockSpec((tile_m, D), lambda i: (i, 0)),   # x row tile
                    pl.BlockSpec((1, D), lambda i: (0, 0)),        # gamma
                    pl.BlockSpec((1, D), lambda i: (0, 0)),        # beta
                    pl.BlockSpec((D, Dff), lambda i: (0, 0)),      # W1 (resident)
                    pl.BlockSpec((1, Dff), lambda i: (0, 0)),      # b1
                    pl.BlockSpec((Dff, D), lambda i: (0, 0)),      # W2 (resident)
                    pl.BlockSpec((1, D), lambda i: (0, 0)),        # b2
                ],
                out_specs=pl.BlockSpec((tile_m, D), lambda i: (i, 0)),
            ),
            compiler_params=pltpu.CompilerParams(
                dimension_semantics=("parallel",),
                vmem_limit_bytes=vmem_limit,
            ),
        )(x2d, gamma2d, beta2d, w1, b1_2d, w2, b2_2d)
    else:
        # ---------------- streamed-weights path (Dff reduction axis last) ------------
        grid = (rows // tile_m, Dff // tile_k)
        out2d = pl.pallas_call(
            ffn_sublayer_streamed_kernel,
            out_shape=jax.ShapeDtypeStruct((rows, D), x.dtype),
            grid_spec=pltpu.PrefetchScalarGridSpec(
                num_scalar_prefetch=0,
                grid=grid,
                in_specs=[
                    pl.BlockSpec((tile_m, D), lambda i, k: (i, 0)),   # x row tile
                    pl.BlockSpec((1, D), lambda i, k: (0, 0)),        # gamma
                    pl.BlockSpec((1, D), lambda i, k: (0, 0)),        # beta
                    pl.BlockSpec((D, tile_k), lambda i, k: (0, k)),   # W1 column tile
                    pl.BlockSpec((1, tile_k), lambda i, k: (0, k)),   # b1 tile
                    pl.BlockSpec((tile_k, D), lambda i, k: (k, 0)),   # W2 row tile
                    pl.BlockSpec((1, D), lambda i, k: (0, 0)),        # b2
                ],
                out_specs=pl.BlockSpec((tile_m, D), lambda i, k: (i, 0)),
                scratch_shapes=[
                    pltpu.VMEM((tile_m, D), jnp.bfloat16),   # cached LN output
                    pltpu.VMEM((tile_m, D), jnp.float32),    # f32 accumulator
                ],
            ),
            compiler_params=pltpu.CompilerParams(
                dimension_semantics=("parallel", "arbitrary"),
                vmem_limit_bytes=vmem_limit,
            ),
        )(x2d, gamma2d, beta2d, w1, b1_2d, w2, b2_2d)

    return out2d.reshape(B, S, D)


def feed_forward_sublayer(x, gamma, beta, w1, b1, w2, b2, *, tile_m=None, tile_k=None):
    B, S, D = x.shape
    Dff = w1.shape[1]
    rows = B * S

    # Weights should be stored in bf16 by the caller (avoids a per-call HBM-sized
    # convert pass); cast only if strictly necessary.
    if w1.dtype != jnp.bfloat16:
        w1 = w1.astype(jnp.bfloat16)
    if w2.dtype != jnp.bfloat16:
        w2 = w2.astype(jnp.bfloat16)

    x_bytes = x.dtype.itemsize
    vmem_cap = _vmem_capacity_bytes()
    budget = int(vmem_cap * 0.70)        # headroom for Mosaic internal scratch
    vmem_limit = int(vmem_cap * 0.85)

    auto_tm, auto_tk = _choose_tiles(rows, D, Dff, x_bytes, budget)
    tile_m = auto_tm if tile_m is None else min(tile_m, rows)
    tile_k = auto_tk if tile_k is None else min(tile_k, Dff)

    assert rows % tile_m == 0, "B*S must be divisible by tile_m"
    assert Dff % tile_k == 0, "Dff must be divisible by tile_k"
    assert tile_m % 8 == 0 or tile_m == rows, "tile_m must be a multiple of 8 (sublanes)"
    assert tile_k % 128 == 0 or tile_k == Dff, "tile_k must be a multiple of 128 (lanes)"

    return _ffn_sublayer_impl(x, gamma, beta, w1, b1, w2, b2,
                              tile_m=tile_m, tile_k=tile_k, vmem_limit=vmem_limit)


# ------------------------------------------------------------------------- reference

def reference(x, gamma, beta, w1, b1, w2, b2):
    xf = x.astype(jnp.float32)
    mean = jnp.mean(xf, axis=-1, keepdims=True)
    var = jnp.mean((xf - mean) ** 2, axis=-1, keepdims=True)
    xn = (xf - mean) * jax.lax.rsqrt(var + LN_EPS) * gamma + beta
    h = jnp.maximum(xn @ w1 + b1, 0.0)
    y = h @ w2 + b2
    return x + y


if __name__ == "__main__":
    # Small shapes consistent with a transformer encoder sublayer.
    B, S, D, Dff = 4, 64, 128, 256

    key = jax.random.PRNGKey(0)
    kx, kw1, kb1, kw2, kb2 = jax.random.split(key, 5)

    x = jax.random.normal(kx, (B, S, D), dtype=jnp.float32)
    gamma = jnp.ones((D,), dtype=jnp.float32)
    beta = jnp.zeros((D,), dtype=jnp.float32)
    w1 = jax.random.normal(kw1, (D, Dff), dtype=jnp.float32) * 0.02
    b1 = jax.random.normal(kb1, (Dff,), dtype=jnp.float32) * 0.02
    w2 = jax.random.normal(kw2, (Dff, D), dtype=jnp.float32) * 0.02
    b2 = jax.random.normal(kb2, (D,), dtype=jnp.float32) * 0.02

    # Store weights in MXU-native bf16 once (hoists the cast out of the per-call path).
    w1_bf = w1.astype(jnp.bfloat16)
    w2_bf = w2.astype(jnp.bfloat16)

    ref = reference(x, gamma, beta, w1, b1, w2, b2)

    # Auto tile selection -> resident-weights fast path at these shapes.
    out = feed_forward_sublayer(x, gamma, beta, w1_bf, b1, w2_bf, b2)
    out = jax.block_until_ready(out)
    assert out.shape == (B, S, D)
    err = float(jnp.max(jnp.abs(out - ref)))
    # bf16 matmul inputs -> loosened tolerance vs. the f32 reference.
    assert jnp.allclose(out, ref, atol=2e-2, rtol=2e-2), f"resident path mismatch (max_err={err})"

    # Force the streamed-weights accumulator path to exercise the Dff reduction axis.
    out_s = feed_forward_sublayer(x, gamma, beta, w1_bf, b1, w2_bf, b2,
                                  tile_m=128, tile_k=128)
    out_s = jax.block_until_ready(out_s)
    err_s = float(jnp.max(jnp.abs(out_s - ref)))
    assert jnp.allclose(out_s, ref, atol=2e-2, rtol=2e-2), f"streamed path mismatch (max_err={err_s})"

    print("KERNEL_OK")
</pallas_src>

<mosaic_0001>
module attributes {stable_mosaic.version = 11 : i64} {
  func.func @ffn_sublayer_resident_kernel(%arg0: i32, %arg1: memref<256x128xf32, #tpu.memory_space<vmem>>, %arg2: memref<1x128xf32, #tpu.memory_space<vmem>>, %arg3: memref<1x128xf32, #tpu.memory_space<vmem>>, %arg4: memref<128x256xbf16, #tpu.memory_space<vmem>>, %arg5: memref<1x256xf32, #tpu.memory_space<vmem>>, %arg6: memref<256x128xbf16, #tpu.memory_space<vmem>>, %arg7: memref<1x128xf32, #tpu.memory_space<vmem>>, %arg8: memref<256x128xf32, #tpu.memory_space<vmem>>) attributes {dimension_semantics = [#tpu.dimension_semantics<parallel>], iteration_bounds = array<i64: 1>, scalar_prefetch = 0 : i64, scratch_operands = 0 : i64, tpu.core_type = #tpu.core_type<tc>, window_params = [{transform_indices = @transform_0, window_bounds = array<i64: 256, 128>}, {pipeline_mode = #tpu.pipeline_mode<synchronous>, transform_indices = @transform_1, window_bounds = array<i64: 1, 128>}, {pipeline_mode = #tpu.pipeline_mode<synchronous>, transform_indices = @transform_2, window_bounds = array<i64: 1, 128>}, {pipeline_mode = #tpu.pipeline_mode<synchronous>, transform_indices = @transform_3, window_bounds = array<i64: 128, 256>}, {pipeline_mode = #tpu.pipeline_mode<synchronous>, transform_indices = @transform_4, window_bounds = array<i64: 1, 256>}, {pipeline_mode = #tpu.pipeline_mode<synchronous>, transform_indices = @transform_5, window_bounds = array<i64: 256, 128>}, {pipeline_mode = #tpu.pipeline_mode<synchronous>, transform_indices = @transform_6, window_bounds = array<i64: 1, 128>}, {transform_indices = @transform_7, window_bounds = array<i64: 256, 128>}]} {
    %c0 = arith.constant 0 : index
    %c0_0 = arith.constant 0 : index
    %0 = vector.load %arg1[%c0, %c0_0] : memref<256x128xf32, #tpu.memory_space<vmem>>, vector<256x128xf32>
    %cst = arith.constant dense<0.000000e+00> : vector<256xf32>
    %1 = vector.multi_reduction <add>, %0, %cst [1] : vector<256x128xf32> to vector<256xf32>
    %2 = vector.shape_cast %1 : vector<256xf32> to vector<256x1xf32>
    %cst_1 = arith.constant 1.280000e+02 : f32
    %3 = vector.broadcast %cst_1 : f32 to vector<256x1xf32>
    %4 = arith.divf %2, %3 : vector<256x1xf32>
    %5 = vector.broadcast %4 : vector<256x1xf32> to vector<256x128xf32>
    %6 = arith.subf %0, %5 : vector<256x128xf32>
    %7 = arith.mulf %6, %6 : vector<256x128xf32>
    %cst_2 = arith.constant dense<0.000000e+00> : vector<256xf32>
    %8 = vector.multi_reduction <add>, %7, %cst_2 [1] : vector<256x128xf32> to vector<256xf32>
    %9 = vector.shape_cast %8 : vector<256xf32> to vector<256x1xf32>
    %cst_3 = arith.constant 1.280000e+02 : f32
    %10 = vector.broadcast %cst_3 : f32 to vector<256x1xf32>
    %11 = arith.divf %9, %10 : vector<256x1xf32>
    %cst_4 = arith.constant 9.99999974E-6 : f32
    %12 = vector.broadcast %cst_4 : f32 to vector<256x1xf32>
    %13 = arith.addf %11, %12 : vector<256x1xf32>
    %14 = math.rsqrt %13 : vector<256x1xf32>
    %15 = vector.broadcast %14 : vector<256x1xf32> to vector<256x128xf32>
    %16 = arith.mulf %6, %15 : vector<256x128xf32>
    %c0_5 = arith.constant 0 : index
    %c0_6 = arith.constant 0 : index
    %17 = vector.load %arg2[%c0_5, %c0_6] : memref<1x128xf32, #tpu.memory_space<vmem>>, vector<1x128xf32>
    %18 = vector.broadcast %17 : vector<1x128xf32> to vector<256x128xf32>
    %19 = arith.mulf %16, %18 : vector<256x128xf32>
    %c0_7 = arith.constant 0 : index
    %c0_8 = arith.constant 0 : index
    %20 = vector.load %arg3[%c0_7, %c0_8] : memref<1x128xf32, #tpu.memory_space<vmem>>, vector<1x128xf32>
    %21 = vector.broadcast %20 : vector<1x128xf32> to vector<256x128xf32>
    %22 = arith.addf %19, %21 : vector<256x128xf32>
    %23 = arith.truncf %22 : vector<256x128xf32> to vector<256x128xbf16>
    %c0_9 = arith.constant 0 : index
    %c0_10 = arith.constant 0 : index
    %24 = vector.load %arg4[%c0_9, %c0_10] : memref<128x256xbf16, #tpu.memory_space<vmem>>, vector<128x256xbf16>
    %cst_11 = arith.constant dense<0.000000e+00> : vector<256x256xf32>
    %25 = tpu.matmul %23, %24, %cst_11 {dimension_numbers = #tpu.dot_dimension_numbers<[1], [0], [0], [1], [0, 0, 1, 1], [], []>} : vector<256x128xbf16>, vector<128x256xbf16>, vector<256x256xf32> -> vector<256x256xf32>
    %c0_12 = arith.constant 0 : index
    %c0_13 = arith.constant 0 : index
    %26 = vector.load %arg5[%c0_12, %c0_13] : memref<1x256xf32, #tpu.memory_space<vmem>>, vector<1x256xf32>
    %27 = vector.broadcast %26 : vector<1x256xf32> to vector<256x256xf32>
    %28 = arith.addf %25, %27 : vector<256x256xf32>
    %cst_14 = arith.constant 0.000000e+00 : f32
    %29 = vector.broadcast %cst_14 : f32 to vector<256x256xf32>
    %30 = arith.maximumf %28, %29 : vector<256x256xf32>
    %31 = arith.truncf %30 : vector<256x256xf32> to vector<256x256xbf16>
    %c0_15 = arith.constant 0 : index
    %c0_16 = arith.constant 0 : index
    %32 = vector.load %arg6[%c0_15, %c0_16] : memref<256x128xbf16, #tpu.memory_space<vmem>>, vector<256x128xbf16>
    %cst_17 = arith.constant dense<0.000000e+00> : vector<256x128xf32>
    %33 = tpu.matmul %31, %32, %cst_17 {dimension_numbers = #tpu.dot_dimension_numbers<[1], [0], [0], [1], [0, 0, 1, 1], [], []>} : vector<256x256xbf16>, vector<256x128xbf16>, vector<256x128xf32> -> vector<256x128xf32>
    %34 = arith.addf %0, %33 : vector<256x128xf32>
    %c0_18 = arith.constant 0 : index
    %c0_19 = arith.constant 0 : index
    %35 = vector.load %arg7[%c0_18, %c0_19] : memref<1x128xf32, #tpu.memory_space<vmem>>, vector<1x128xf32>
    %36 = vector.broadcast %35 : vector<1x128xf32> to vector<256x128xf32>
    %37 = arith.addf %34, %36 : vector<256x128xf32>
    %c0_20 = arith.constant 0 : index
    %c0_21 = arith.constant 0 : index
    %38 = vector.load %arg8[%c0_20, %c0_21] : memref<256x128xf32, #tpu.memory_space<vmem>>, vector<256x128xf32>
    tpu.vector_store %arg8[%c0_20, %c0_21], %37 {strides = array<i32>} : memref<256x128xf32, #tpu.memory_space<vmem>>, vector<256x128xf32>,
    return
  }
  func.func @transform_0(%arg0: i32) -> (i32, i32) {
    %c0_i32 = arith.constant 0 : i32
    %c0_i32_0 = arith.constant 0 : i32
    return %arg0, %c0_i32 : i32, i32
  }
  func.func @transform_1(%arg0: i32) -> (i32, i32) {
    %c0_i32 = arith.constant 0 : i32
    %c0_i32_0 = arith.constant 0 : i32
    %c0_i32_1 = arith.constant 0 : i32
    return %c0_i32, %c0_i32_0 : i32, i32
  }
  func.func @transform_2(%arg0: i32) -> (i32, i32) {
    %c0_i32 = arith.constant 0 : i32
    %c0_i32_0 = arith.constant 0 : i32
    %c0_i32_1 = arith.constant 0 : i32
    return %c0_i32, %c0_i32_0 : i32, i32
  }
  func.func @transform_3(%arg0: i32) -> (i32, i32) {
    %c0_i32 = arith.constant 0 : i32
    %c0_i32_0 = arith.constant 0 : i32
    %c0_i32_1 = arith.constant 0 : i32
    return %c0_i32, %c0_i32_0 : i32, i32
  }
  func.func @transform_4(%arg0: i32) -> (i32, i32) {
    %c0_i32 = arith.constant 0 : i32
    %c0_i32_0 = arith.constant 0 : i32
    %c0_i32_1 = arith.constant 0 : i32
    return %c0_i32, %c0_i32_0 : i32, i32
  }
  func.func @transform_5(%arg0: i32) -> (i32, i32) {
    %c0_i32 = arith.constant 0 : i32
    %c0_i32_0 = arith.constant 0 : i32
    %c0_i32_1 = arith.constant 0 : i32
    return %c0_i32, %c0_i32_0 : i32, i32
  }
  func.func @transform_6(%arg0: i32) -> (i32, i32) {
    %c0_i32 = arith.constant 0 : i32
    %c0_i32_0 = arith.constant 0 : i32
    %c0_i32_1 = arith.constant 0 : i32
    return %c0_i32, %c0_i32_0 : i32, i32
  }
  func.func @transform_7(%arg0: i32) -> (i32, i32) {
    %c0_i32 = arith.constant 0 : i32
    %c0_i32_0 = arith.constant 0 : i32
    return %arg0, %c0_i32 : i32, i32
  }
}

</mosaic_0001>

<llo_original>
// kernel: _ffn_sublayer_impl.1
$region0: #{_ffn_sublayer_impl.1}
  #allocation0 [shape = 'u32[]', space=smem, size = 0x4, offset = 0x4, fixed_abs, tag = 'smem constant byte address 0x4 - core index']
  #allocation1 [shape = 'u32[144,128]{1,0:T(1,128)}', space=vmem, size = 0x12000, scoped, tag = 'internal scratch']
  %s0 = inlined_call_operand.hbm [shape: f32[256,128], index: 0, kind: input, shape index: {}]
  %s1 = inlined_call_operand.vmem [shape: f32[1,128], index: 1, kind: input, shape index: {}]
  %s2 = inlined_call_operand.vmem [shape: f32[1,128], index: 2, kind: input, shape index: {}]
  %s3 = inlined_call_operand.hbm [shape: bf16[128,256], index: 3, kind: input, shape index: {}]
  %s4 = inlined_call_operand.vmem [shape: f32[1,256], index: 4, kind: input, shape index: {}]
  %s5 = inlined_call_operand.hbm [shape: bf16[256,128], index: 5, kind: input, shape index: {}]
  %s6 = inlined_call_operand.vmem [shape: f32[1,128], index: 6, kind: input, shape index: {}]
  %s7 = inlined_call_operand.hbm [shape: f32[256,128], index: 7, kind: output, shape index: {}]
  %s8 = sld [smem:[#allocation0]]
  $region50: #{_ffn_sublayer_impl.1} parent=0
    _
  %s10 = ssub.s32 1, %s8
  %s11 = scalar_select 0, %s10, %s8
  $region1: #{_ffn_sublayer_impl.1} parent=0
    #allocation2 [shape = 'u8[131072]{0}', space=vmem, size = 0x20000, scoped, tag = 'input window, operand 0, single buffered']
    #allocation3 [shape = 's32[1]{0}', space=sflag, size = 0x4, scoped, tag = 'scoped memory for _ffn_sublayer_impl.1']
    #allocation4 [shape = 's32[1]{0}', space=sflag, size = 0x4, scoped, tag = 'scoped memory for _ffn_sublayer_impl.1']
    #allocation5 [shape = 'u8[65536]{0}', space=vmem, size = 0x10000, scoped, tag = 'input window, operand 3, single buffered']
    #allocation6 [shape = 's32[1]{0}', space=sflag, size = 0x4, scoped, tag = 'scoped memory for _ffn_sublayer_impl.1']
    #allocation7 [shape = 'u8[65536]{0}', space=vmem, size = 0x10000, scoped, tag = 'input window, operand 5, single buffered']
    #allocation8 [shape = 'u8[131072]{0}', space=vmem, size = 0x20000, scoped, tag = 'output window, operand 0, single buffered']
    %12 = vsyncpa [#allocation3], 0
    %13 = vsyncpa [#allocation6], 0
    %14 = vsyncpa [#allocation4], 0
    // Predicated region
    $region2: #{_ffn_sublayer_impl.1} parent=1 // pred_check
      _
    $region3: #{_ffn_sublayer_impl.1} parent=1 // pred_check_branch
      %16 = sbr.rel (0) target = $region5
    $region4: #{_ffn_sublayer_impl.1} parent=1 // pred_region
      %s18 = ssub.s32 4096, 4096
      %19 = vsyncadd [#allocation3], %s18
      %s20 = sshll.u32 [#allocation2], 4
      %s21 = int_to_ptr.vmem [resolvable:$true] %s20
      %26 = dma.hbm_to_vmem [thread:$0]  %s0, 4096, %s21, [#allocation3], 128, 128, 8
    $region5: #{_ffn_sublayer_impl.1} parent=1 // pred_fallthru
      _
    // Predicated region
    $region6: #{_ffn_sublayer_impl.1} parent=1 // pred_check
      _
    $region7: #{_ffn_sublayer_impl.1} parent=1 // pred_check_branch
      %28 = sbr.rel (0) target = $region9
    $region8: #{_ffn_sublayer_impl.1} parent=1 // pred_region
      _
    $region9: #{_ffn_sublayer_impl.1} parent=1 // pred_fallthru
      _
    // Predicated region
    $region10: #{_ffn_sublayer_impl.1} parent=1 // pred_check
      _
    $region11: #{_ffn_sublayer_impl.1} parent=1 // pred_check_branch
      %30 = sbr.rel (0) target = $region13
    $region12: #{_ffn_sublayer_impl.1} parent=1 // pred_region
      _
    $region13: #{_ffn_sublayer_impl.1} parent=1 // pred_fallthru
      _
    // Predicated region
    $region14: #{_ffn_sublayer_impl.1} parent=1 // pred_check
      _
    $region15: #{_ffn_sublayer_impl.1} parent=1 // pred_check_branch
      %32 = sbr.rel (0) target = $region17
    $region16: #{_ffn_sublayer_impl.1} parent=1 // pred_region
      %s34 = ssub.s32 2048, 2048
      %35 = vsyncadd [#allocation6], %s34
      %s36 = sshll.u32 [#allocation5], 4
      %s37 = int_to_ptr.vmem [resolvable:$true] %s36
      %42 = dma.hbm_to_vmem [thread:$0]  %s3, 2048, %s37, [#allocation6], 128, 128, 8
    $region17: #{_ffn_sublayer_impl.1} parent=1 // pred_fallthru
      _
    // Predicated region
    $region18: #{_ffn_sublayer_impl.1} parent=1 // pred_check
      _
    $region19: #{_ffn_sublayer_impl.1} parent=1 // pred_check_branch
      %44 = sbr.rel (0) target = $region21
    $region20: #{_ffn_sublayer_impl.1} parent=1 // pred_region
      _
    $region21: #{_ffn_sublayer_impl.1} parent=1 // pred_fallthru
      _
    // Predicated region
    $region22: #{_ffn_sublayer_impl.1} parent=1 // pred_check
      _
    $region23: #{_ffn_sublayer_impl.1} parent=1 // pred_check_branch
      %46 = sbr.rel (0) target = $region25
    $region24: #{_ffn_sublayer_impl.1} parent=1 // pred_region
      %s48 = ssub.s32 2048, 2048
      %49 = vsyncadd [#allocation6], %s48
      %s50 = sshll.u32 [#allocation7], 4
      %s51 = int_to_ptr.vmem [resolvable:$true] %s50
      %56 = dma.hbm_to_vmem [thread:$0]  %s5, 2048, %s51, [#allocation6], 64, 64, 4
    $region25: #{_ffn_sublayer_impl.1} parent=1 // pred_fallthru
      _
    // Predicated region
    $region26: #{_ffn_sublayer_impl.1} parent=1 // pred_check
      _
    $region27: #{_ffn_sublayer_impl.1} parent=1 // pred_check_branch
      %58 = sbr.rel (0) target = $region29
    $region28: #{_ffn_sublayer_impl.1} parent=1 // pred_region
      _
    $region29: #{_ffn_sublayer_impl.1} parent=1 // pred_fallthru
      _
    // Predicated region
    $region30: #{_ffn_sublayer_impl.1} parent=1 // pred_check
      _
    $region31: #{_ffn_sublayer_impl.1} parent=1 // pred_check_branch
      %60 = sbr.rel (0) target = $region33
    $region32: #{_ffn_sublayer_impl.1} parent=1 // pred_region
      %61 = dma.done [#allocation3], 4096
    $region33: #{_ffn_sublayer_impl.1} parent=1 // pred_fallthru
      _
    // Predicated region
    $region34: #{_ffn_sublayer_impl.1} parent=1 // pred_check
      _
    $region35: #{_ffn_sublayer_impl.1} parent=1 // pred_check_branch
      %63 = sbr.rel (0) target = $region37
    $region36: #{_ffn_sublayer_impl.1} parent=1 // pred_region
      %64 = dma.done [#allocation6], 2048
    $region37: #{_ffn_sublayer_impl.1} parent=1 // pred_fallthru
      _
    // Predicated region
    $region38: #{_ffn_sublayer_impl.1} parent=1 // pred_check
      _
    $region39: #{_ffn_sublayer_impl.1} parent=1 // pred_check_branch
      %66 = sbr.rel (0) target = $region41
    $region40: #{_ffn_sublayer_impl.1} parent=1 // pred_region
      %67 = dma.done [#allocation6], 2048
    $region41: #{_ffn_sublayer_impl.1} parent=1 // pred_fallthru
      _
    %v69 = vld [vmem:[#allocation2] sm:$0xff]
    %v70 = vld [vmem:[#allocation2 + $0x8] sm:$0xff]
    %v71 = vld [vmem:[#allocation2 + $0x10] sm:$0xff]
    %v72 = vld [vmem:[#allocation2 + $0x18] sm:$0xff]
    %v73 = vld [vmem:[#allocation2 + $0x20] sm:$0xff]
    %v74 = vld [vmem:[#allocation2 + $0x28] sm:$0xff]
    %v75 = vld [vmem:[#allocation2 + $0x30] sm:$0xff]
    %v76 = vld [vmem:[#allocation2 + $0x38] sm:$0xff]
    %v77 = vld [vmem:[#allocation2 + $0x40] sm:$0xff]
    %v78 = vld [vmem:[#allocation2 + $0x48] sm:$0xff]
    %v79 = vld [vmem:[#allocation2 + $0x50] sm:$0xff]
    %v80 = vld [vmem:[#allocation2 + $0x58] sm:$0xff]
    %v81 = vld [vmem:[#allocation2 + $0x60] sm:$0xff]
    %v82 = vld [vmem:[#allocation2 + $0x68] sm:$0xff]
    %v83 = vld [vmem:[#allocation2 + $0x70] sm:$0xff]
    %v84 = vld [vmem:[#allocation2 + $0x78] sm:$0xff]
    %v85 = vld [vmem:[#allocation2 + $0x80] sm:$0xff]
    %v86 = vld [vmem:[#allocation2 + $0x88] sm:$0xff]
    %v87 = vld [vmem:[#allocation2 + $0x90] sm:$0xff]
    %v88 = vld [vmem:[#allocation2 + $0x98] sm:$0xff]
    %v89 = vld [vmem:[#allocation2 + $0xa0] sm:$0xff]
    %v90 = vld [vmem:[#allocation2 + $0xa8] sm:$0xff]
    %v91 = vld [vmem:[#allocation2 + $0xb0] sm:$0xff]
    %v92 = vld [vmem:[#allocation2 + $0xb8] sm:$0xff]
    %v93 = vld [vmem:[#allocation2 + $0xc0] sm:$0xff]
    %v94 = vld [vmem:[#allocation2 + $0xc8] sm:$0xff]
    %v95 = vld [vmem:[#allocation2 + $0xd0] sm:$0xff]
    %v96 = vld [vmem:[#allocation2 + $0xd8] sm:$0xff]
    %v97 = vld [vmem:[#allocation2 + $0xe0] sm:$0xff]
    %v98 = vld [vmem:[#allocation2 + $0xe8] sm:$0xff]
    %v99 = vld [vmem:[#allocation2 + $0xf0] sm:$0xff]
    %v100 = vld [vmem:[#allocation2 + $0xf8] sm:$0xff]
    %101 = vadd.xlane.f32.xlu0 %v69
    %v102 = vpop.xlane.xlu0 %101
    %103 = vadd.xlane.f32.xlu0 %v70
    %v104 = vpop.xlane.xlu0 %103
    %105 = vadd.xlane.f32.xlu0 %v71
    %v106 = vpop.xlane.xlu0 %105
    %107 = vadd.xlane.f32.xlu0 %v72
    %v108 = vpop.xlane.xlu0 %107
    %109 = vadd.xlane.f32.xlu0 %v73
    %v110 = vpop.xlane.xlu0 %109
    %111 = vadd.xlane.f32.xlu0 %v74
    %v112 = vpop.xlane.xlu0 %111
    %113 = vadd.xlane.f32.xlu0 %v75
    %v114 = vpop.xlane.xlu0 %113
    %115 = vadd.xlane.f32.xlu0 %v76
    %v116 = vpop.xlane.xlu0 %115
    %117 = vadd.xlane.f32.xlu0 %v77
    %v118 = vpop.xlane.xlu0 %117
    %119 = vadd.xlane.f32.xlu0 %v78
    %v120 = vpop.xlane.xlu0 %119
    %121 = vadd.xlane.f32.xlu0 %v79
    %v122 = vpop.xlane.xlu0 %121
    %123 = vadd.xlane.f32.xlu0 %v80
    %v124 = vpop.xlane.xlu0 %123
    %125 = vadd.xlane.f32.xlu0 %v81
    %v126 = vpop.xlane.xlu0 %125
    %127 = vadd.xlane.f32.xlu0 %v82
    %v128 = vpop.xlane.xlu0 %127
    %129 = vadd.xlane.f32.xlu0 %v83
    %v130 = vpop.xlane.xlu0 %129
    %131 = vadd.xlane.f32.xlu0 %v84
    %v132 = vpop.xlane.xlu0 %131
    %133 = vadd.xlane.f32.xlu0 %v85
    %v134 = vpop.xlane.xlu0 %133
    %135 = vadd.xlane.f32.xlu0 %v86
    %v136 = vpop.xlane.xlu0 %135
    %137 = vadd.xlane.f32.xlu0 %v87
    %v138 = vpop.xlane.xlu0 %137
    %139 = vadd.xlane.f32.xlu0 %v88
    %v140 = vpop.xlane.xlu0 %139
    %141 = vadd.xlane.f32.xlu0 %v89
    %v142 = vpop.xlane.xlu0 %141
    %143 = vadd.xlane.f32.xlu0 %v90
    %v144 = vpop.xlane.xlu0 %143
    %145 = vadd.xlane.f32.xlu0 %v91
    %v146 = vpop.xlane.xlu0 %145
    %147 = vadd.xlane.f32.xlu0 %v92
    %v148 = vpop.xlane.xlu0 %147
    %149 = vadd.xlane.f32.xlu0 %v93
    %v150 = vpop.xlane.xlu0 %149
    %151 = vadd.xlane.f32.xlu0 %v94
    %v152 = vpop.xlane.xlu0 %151
    %153 = vadd.xlane.f32.xlu0 %v95
    %v154 = vpop.xlane.xlu0 %153
    %155 = vadd.xlane.f32.xlu0 %v96
    %v156 = vpop.xlane.xlu0 %155
    %157 = vadd.xlane.f32.xlu0 %v97
    %v158 = vpop.xlane.xlu0 %157
    %159 = vadd.xlane.f32.xlu0 %v98
    %v160 = vpop.xlane.xlu0 %159
    %161 = vadd.xlane.f32.xlu0 %v99
    %v162 = vpop.xlane.xlu0 %161
    %163 = vadd.xlane.f32.xlu0 %v100
    %v164 = vpop.xlane.xlu0 %163
    %v165 = vrcp.pop 128.0
    %v166 = vmul.f32 %v102, %v165
    %v167 = vmul.f32 %v104, %v165
    %v168 = vmul.f32 %v106, %v165
    %v169 = vmul.f32 %v108, %v165
    %v170 = vmul.f32 %v110, %v165
    %v171 = vmul.f32 %v112, %v165
    %v172 = vmul.f32 %v114, %v165
    %v173 = vmul.f32 %v116, %v165
    %v174 = vmul.f32 %v118, %v165
    %v175 = vmul.f32 %v120, %v165
    %v176 = vmul.f32 %v122, %v165
    %v177 = vmul.f32 %v124, %v165
    %v178 = vmul.f32 %v126, %v165
    %v179 = vmul.f32 %v128, %v165
    %v180 = vmul.f32 %v130, %v165
    %v181 = vmul.f32 %v132, %v165
    %v182 = vmul.f32 %v134, %v165
    %v183 = vmul.f32 %v136, %v165
    %v184 = vmul.f32 %v138, %v165
    %v185 = vmul.f32 %v140, %v165
    %v186 = vmul.f32 %v142, %v165
    %v187 = vmul.f32 %v144, %v165
    %v188 = vmul.f32 %v146, %v165
    %v189 = vmul.f32 %v148, %v165
    %v190 = vmul.f32 %v150, %v165
    %v191 = vmul.f32 %v152, %v165
    %v192 = vmul.f32 %v154, %v165
    %v193 = vmul.f32 %v156, %v165
    %v194 = vmul.f32 %v158, %v165
    %v195 = vmul.f32 %v160, %v165
    %v196 = vmul.f32 %v162, %v165
    %v197 = vmul.f32 %v164, %v165
    %v198 = vsub.f32 %v69, %v166
    %v199 = vsub.f32 %v70, %v167
    %v200 = vsub.f32 %v71, %v168
    %v201 = vsub.f32 %v72, %v169
    %v202 = vsub.f32 %v73, %v170
    %v203 = vsub.f32 %v74, %v171
    %v204 = vsub.f32 %v75, %v172
    %v205 = vsub.f32 %v76, %v173
    %v206 = vsub.f32 %v77, %v174
    %v207 = vsub.f32 %v78, %v175
    %v208 = vsub.f32 %v79, %v176
    %v209 = vsub.f32 %v80, %v177
    %v210 = vsub.f32 %v81, %v178
    %v211 = vsub.f32 %v82, %v179
    %v212 = vsub.f32 %v83, %v180
    %v213 = vsub.f32 %v84, %v181
    %v214 = vsub.f32 %v85, %v182
    %v215 = vsub.f32 %v86, %v183
    %v216 = vsub.f32 %v87, %v184
    %v217 = vsub.f32 %v88, %v185
    %v218 = vsub.f32 %v89, %v186
    %v219 = vsub.f32 %v90, %v187
    %v220 = vsub.f32 %v91, %v188
    %v221 = vsub.f32 %v92, %v189
    %v222 = vsub.f32 %v93, %v190
    %v223 = vsub.f32 %v94, %v191
    %v224 = vsub.f32 %v95, %v192
    %v225 = vsub.f32 %v96, %v193
    %v226 = vsub.f32 %v97, %v194
    %v227 = vsub.f32 %v98, %v195
    %v228 = vsub.f32 %v99, %v196
    %v229 = vsub.f32 %v100, %v197
    %v230 = vmul.f32 %v198, %v198
    %v231 = vmul.f32 %v199, %v199
    %v232 = vmul.f32 %v200, %v200
    %v233 = vmul.f32 %v201, %v201
    %v234 = vmul.f32 %v202, %v202
    %v235 = vmul.f32 %v203, %v203
    %v236 = vmul.f32 %v204, %v204
    %v237 = vmul.f32 %v205, %v205
    %v238 = vmul.f32 %v206, %v206
    %v239 = vmul.f32 %v207, %v207
    %v240 = vmul.f32 %v208, %v208
    %v241 = vmul.f32 %v209, %v209
    %v242 = vmul.f32 %v210, %v210
    %v243 = vmul.f32 %v211, %v211
    %v244 = vmul.f32 %v212, %v212
    %v245 = vmul.f32 %v213, %v213
    %v246 = vmul.f32 %v214, %v214
    %v247 = vmul.f32 %v215, %v215
    %v248 = vmul.f32 %v216, %v216
    %v249 = vmul.f32 %v217, %v217
    %v250 = vmul.f32 %v218, %v218
    %v251 = vmul.f32 %v219, %v219
    %v252 = vmul.f32 %v220, %v220
    %v253 = vmul.f32 %v221, %v221
    %v254 = vmul.f32 %v222, %v222
    %v255 = vmul.f32 %v223, %v223
    %v256 = vmul.f32 %v224, %v224
    %v257 = vmul.f32 %v225, %v225
    %v258 = vmul.f32 %v226, %v226
    %v259 = vmul.f32 %v227, %v227
    %v260 = vmul.f32 %v228, %v228
    %v261 = vmul.f32 %v229, %v229
    %262 = vadd.xlane.f32.xlu0 %v230
    %v263 = vpop.xlane.xlu0 %262
    %264 = vadd.xlane.f32.xlu0 %v231
    %v265 = vpop.xlane.xlu0 %264
    %266 = vadd.xlane.f32.xlu0 %v232
    %v267 = vpop.xlane.xlu0 %266
    %268 = vadd.xlane.f32.xlu0 %v233
    %v269 = vpop.xlane.xlu0 %268
    %270 = vadd.xlane.f32.xlu0 %v234
    %v271 = vpop.xlane.xlu0 %270
    %272 = vadd.xlane.f32.xlu0 %v235
    %v273 = vpop.xlane.xlu0 %272
    %274 = vadd.xlane.f32.xlu0 %v236
    %v275 = vpop.xlane.xlu0 %274
    %276 = vadd.xlane.f32.xlu0 %v237
    %v277 = vpop.xlane.xlu0 %276
    %278 = vadd.xlane.f32.xlu0 %v238
    %v279 = vpop.xlane.xlu0 %278
    %280 = vadd.xlane.f32.xlu0 %v239
    %v281 = vpop.xlane.xlu0 %280
    %282 = vadd.xlane.f32.xlu0 %v240
    %v283 = vpop.xlane.xlu0 %282
    %284 = vadd.xlane.f32.xlu0 %v241
    %v285 = vpop.xlane.xlu0 %284
    %286 = vadd.xlane.f32.xlu0 %v242
    %v287 = vpop.xlane.xlu0 %286
    %288 = vadd.xlane.f32.xlu0 %v243
    %v289 = vpop.xlane.xlu0 %288
    %290 = vadd.xlane.f32.xlu0 %v244
    %v291 = vpop.xlane.xlu0 %290
    %292 = vadd.xlane.f32.xlu0 %v245
    %v293 = vpop.xlane.xlu0 %292
    %294 = vadd.xlane.f32.xlu0 %v246
    %v295 = vpop.xlane.xlu0 %294
    %296 = vadd.xlane.f32.xlu0 %v247
    %v297 = vpop.xlane.xlu0 %296
    %298 = vadd.xlane.f32.xlu0 %v248
    %v299 = vpop.xlane.xlu0 %298
    %300 = vadd.xlane.f32.xlu0 %v249
    %v301 = vpop.xlane.xlu0 %300
    %302 = vadd.xlane.f32.xlu0 %v250
    %v303 = vpop.xlane.xlu0 %302
    %304 = vadd.xlane.f32.xlu0 %v251
    %v305 = vpop.xlane.xlu0 %304
    %306 = vadd.xlane.f32.xlu0 %v252
    %v307 = vpop.xlane.xlu0 %306
    %308 = vadd.xlane.f32.xlu0 %v253
    %v309 = vpop.xlane.xlu0 %308
    %310 = vadd.xlane.f32.xlu0 %v254
    %v311 = vpop.xlane.xlu0 %310
    %312 = vadd.xlane.f32.xlu0 %v255
    %v313 = vpop.xlane.xlu0 %312
    %314 = vadd.xlane.f32.xlu0 %v256
    %v315 = vpop.xlane.xlu0 %314
    %316 = vadd.xlane.f32.xlu0 %v257
    %v317 = vpop.xlane.xlu0 %316
    %318 = vadd.xlane.f32.xlu0 %v258
    %v319 = vpop.xlane.xlu0 %318
    %320 = vadd.xlane.f32.xlu0 %v259
    %v321 = vpop.xlane.xlu0 %320
    %322 = vadd.xlane.f32.xlu0 %v260
    %v323 = vpop.xlane.xlu0 %322
    %324 = vadd.xlane.f32.xlu0 %v261
    %v325 = vpop.xlane.xlu0 %324
    %v326 = vmul.f32 %v263, %v165
    %v327 = vmul.f32 %v265, %v165
    %v328 = vmul.f32 %v267, %v165
    %v329 = vmul.f32 %v269, %v165
    %v330 = vmul.f32 %v271, %v165
    %v331 = vmul.f32 %v273, %v165
    %v332 = vmul.f32 %v275, %v165
    %v333 = vmul.f32 %v277, %v165
    %v334 = vmul.f32 %v279, %v165
    %v335 = vmul.f32 %v281, %v165
    %v336 = vmul.f32 %v283, %v165
    %v337 = vmul.f32 %v285, %v165
    %v338 = vmul.f32 %v287, %v165
    %v339 = vmul.f32 %v289, %v165
    %v340 = vmul.f32 %v291, %v165
    %v341 = vmul.f32 %v293, %v165
    %v342 = vmul.f32 %v295, %v165
    %v343 = vmul.f32 %v297, %v165
    %v344 = vmul.f32 %v299, %v165
    %v345 = vmul.f32 %v301, %v165
    %v346 = vmul.f32 %v303, %v165
    %v347 = vmul.f32 %v305, %v165
    %v348 = vmul.f32 %v307, %v165
    %v349 = vmul.f32 %v309, %v165
    %v350 = vmul.f32 %v311, %v165
    %v351 = vmul.f32 %v313, %v165
    %v352 = vmul.f32 %v315, %v165
    %v353 = vmul.f32 %v317, %v165
    %v354 = vmul.f32 %v319, %v165
    %v355 = vmul.f32 %v321, %v165
    %v356 = vmul.f32 %v323, %v165
    %v357 = vmul.f32 %v325, %v165
    %v358 = vadd.f32 %v326, 1e-05
    %v359 = vadd.f32 %v327, 1e-05
    %v360 = vadd.f32 %v328, 1e-05
    %v361 = vadd.f32 %v329, 1e-05
    %v362 = vadd.f32 %v330, 1e-05
    %v363 = vadd.f32 %v331, 1e-05
    %v364 = vadd.f32 %v332, 1e-05
    %v365 = vadd.f32 %v333, 1e-05
    %v366 = vadd.f32 %v334, 1e-05
    %v367 = vadd.f32 %v335, 1e-05
    %v368 = vadd.f32 %v336, 1e-05
    %v369 = vadd.f32 %v337, 1e-05
    %v370 = vadd.f32 %v338, 1e-05
    %v371 = vadd.f32 %v339, 1e-05
    %v372 = vadd.f32 %v340, 1e-05
    %v373 = vadd.f32 %v341, 1e-05
    %v374 = vadd.f32 %v342, 1e-05
    %v375 = vadd.f32 %v343, 1e-05
    %v376 = vadd.f32 %v344, 1e-05
    %v377 = vadd.f32 %v345, 1e-05
    %v378 = vadd.f32 %v346, 1e-05
    %v379 = vadd.f32 %v347, 1e-05
    %v380 = vadd.f32 %v348, 1e-05
    %v381 = vadd.f32 %v349, 1e-05
    %v382 = vadd.f32 %v350, 1e-05
    %v383 = vadd.f32 %v351, 1e-05
    %v384 = vadd.f32 %v352, 1e-05
    %v385 = vadd.f32 %v353, 1e-05
    %v386 = vadd.f32 %v354, 1e-05
    %v387 = vadd.f32 %v355, 1e-05
    %v388 = vadd.f32 %v356, 1e-05
    %v389 = vadd.f32 %v357, 1e-05
    %v390 = vrsqrt.pop %v358
    %v391 = vrsqrt.pop %v359
    %v392 = vrsqrt.pop %v360
    %v393 = vrsqrt.pop %v361
    %v394 = vrsqrt.pop %v362
    %v395 = vrsqrt.pop %v363
    %v396 = vrsqrt.pop %v364
    %v397 = vrsqrt.pop %v365
    %v398 = vrsqrt.pop %v366
    %v399 = vrsqrt.pop %v367
    %v400 = vrsqrt.pop %v368
    %v401 = vrsqrt.pop %v369
    %v402 = vrsqrt.pop %v370
    %v403 = vrsqrt.pop %v371
    %v404 = vrsqrt.pop %v372
    %v405 = vrsqrt.pop %v373
    %v406 = vrsqrt.pop %v374
    %v407 = vrsqrt.pop %v375
    %v408 = vrsqrt.pop %v376
    %v409 = vrsqrt.pop %v377
    %v410 = vrsqrt.pop %v378
    %v411 = vrsqrt.pop %v379
    %v412 = vrsqrt.pop %v380
    %v413 = vrsqrt.pop %v381
    %v414 = vrsqrt.pop %v382
    %v415 = vrsqrt.pop %v383
    %v416 = vrsqrt.pop %v384
    %v417 = vrsqrt.pop %v385
    %v418 = vrsqrt.pop %v386
    %v419 = vrsqrt.pop %v387
    %v420 = vrsqrt.pop %v388
    %v421 = vrsqrt.pop %v389
    %v422 = vmul.f32 %v198, %v390
    %v423 = vmul.f32 %v199, %v391
    %v424 = vmul.f32 %v200, %v392
    %v425 = vmul.f32 %v201, %v393
    %v426 = vmul.f32 %v202, %v394
    %v427 = vmul.f32 %v203, %v395
    %v428 = vmul.f32 %v204, %v396
    %v429 = vmul.f32 %v205, %v397
    %v430 = vmul.f32 %v206, %v398
    %v431 = vmul.f32 %v207, %v399
    %v432 = vmul.f32 %v208, %v400
    %v433 = vmul.f32 %v209, %v401
    %v434 = vmul.f32 %v210, %v402
    %v435 = vmul.f32 %v211, %v403
    %v436 = vmul.f32 %v212, %v404
    %v437 = vmul.f32 %v213, %v405
    %v438 = vmul.f32 %v214, %v406
    %v439 = vmul.f32 %v215, %v407
    %v440 = vmul.f32 %v216, %v408
    %v441 = vmul.f32 %v217, %v409
    %v442 = vmul.f32 %v218, %v410
    %v443 = vmul.f32 %v219, %v411
    %v444 = vmul.f32 %v220, %v412
    %v445 = vmul.f32 %v221, %v413
    %v446 = vmul.f32 %v222, %v414
    %v447 = vmul.f32 %v223, %v415
    %v448 = vmul.f32 %v224, %v416
    %v449 = vmul.f32 %v225, %v417
    %v450 = vmul.f32 %v226, %v418
    %v451 = vmul.f32 %v227, %v419
    %v452 = vmul.f32 %v228, %v420
    %v453 = vmul.f32 %v229, %v421
    %v454 = vld [vmem:[%s1] sm:$0x1]
    %v456 = vlaneseq
    %v457 = vshrl.u32 %v456, 7
    %v458 = vsub.s32 0, %v457
    %v459 = vrot.slane %v454, %v458
    %v461 = vmul.f32 %v422, %v459
    %v462 = vmul.f32 %v423, %v459
    %v463 = vmul.f32 %v424, %v459
    %v464 = vmul.f32 %v425, %v459
    %v465 = vmul.f32 %v426, %v459
    %v466 = vmul.f32 %v427, %v459
    %v467 = vmul.f32 %v428, %v459
    %v468 = vmul.f32 %v429, %v459
    %v469 = vmul.f32 %v430, %v459
    %v470 = vmul.f32 %v431, %v459
    %v471 = vmul.f32 %v432, %v459
    %v472 = vmul.f32 %v433, %v459
    %v473 = vmul.f32 %v434, %v459
    %v474 = vmul.f32 %v435, %v459
    %v475 = vmul.f32 %v436, %v459
    %v476 = vmul.f32 %v437, %v459
    %v477 = vmul.f32 %v438, %v459
    %v478 = vmul.f32 %v439, %v459
    %v479 = vmul.f32 %v440, %v459
    %v480 = vmul.f32 %v441, %v459
    %v481 = vmul.f32 %v442, %v459
    %v482 = vmul.f32 %v443, %v459
    %v483 = vmul.f32 %v444, %v459
    %v484 = vmul.f32 %v445, %v459
    %v485 = vmul.f32 %v446, %v459
    %v486 = vmul.f32 %v447, %v459
    %v487 = vmul.f32 %v448, %v459
    %v488 = vmul.f32 %v449, %v459
    %v489 = vmul.f32 %v450, %v459
    %v490 = vmul.f32 %v451, %v459
    %v491 = vmul.f32 %v452, %v459
    %v492 = vmul.f32 %v453, %v459
    %v493 = vld [vmem:[%s2] sm:$0x1]
    %v495 = vlaneseq
    %v496 = vshrl.u32 %v495, 7
    %v497 = vsub.s32 0, %v496
    %v498 = vrot.slane %v493, %v497
    %v500 = vadd.f32 %v461, %v498
    %v501 = vadd.f32 %v462, %v498
    %v502 = vadd.f32 %v463, %v498
    %v503 = vadd.f32 %v464, %v498
    %v504 = vadd.f32 %v465, %v498
    %v505 = vadd.f32 %v466, %v498
    %v506 = vadd.f32 %v467, %v498
    %v507 = vadd.f32 %v468, %v498
    %v508 = vadd.f32 %v469, %v498
    %v509 = vadd.f32 %v470, %v498
    %v510 = vadd.f32 %v471, %v498
    %v511 = vadd.f32 %v472, %v498
    %v512 = vadd.f32 %v473, %v498
    %v513 = vadd.f32 %v474, %v498
    %v514 = vadd.f32 %v475, %v498
    %v515 = vadd.f32 %v476, %v498
    %v516 = vadd.f32 %v477, %v498
    %v517 = vadd.f32 %v478, %v498
    %v518 = vadd.f32 %v479, %v498
    %v519 = vadd.f32 %v480, %v498
    %v520 = vadd.f32 %v481, %v498
    %v521 = vadd.f32 %v482, %v498
    %v522 = vadd.f32 %v483, %v498
    %v523 = vadd.f32 %v484, %v498
    %v524 = vadd.f32 %v485, %v498
    %v525 = vadd.f32 %v486, %v498
    %v526 = vadd.f32 %v487, %v498
    %v527 = vadd.f32 %v488, %v498
    %v528 = vadd.f32 %v489, %v498
    %v529 = vadd.f32 %v490, %v498
    %v530 = vadd.f32 %v491, %v498
    %v531 = vadd.f32 %v492, %v498
    %v532 = vpack.c.bf16 %v501, %v500
    %v533 = vpack.c.bf16 %v503, %v502
    %v534 = vpack.c.bf16 %v505, %v504
    %v535 = vpack.c.bf16 %v507, %v506
    %v536 = vpack.c.bf16 %v509, %v508
    %v537 = vpack.c.bf16 %v511, %v510
    %v538 = vpack.c.bf16 %v513, %v512
    %v539 = vpack.c.bf16 %v515, %v514
    %v540 = vpack.c.bf16 %v517, %v516
    %v541 = vpack.c.bf16 %v519, %v518
    %v542 = vpack.c.bf16 %v521, %v520
    %v543 = vpack.c.bf16 %v523, %v522
    %v544 = vpack.c.bf16 %v525, %v524
    %v545 = vpack.c.bf16 %v527, %v526
    %v546 = vpack.c.bf16 %v529, %v528
    %v547 = vpack.c.bf16 %v531, %v530
    %v548 = vld [vmem:[#allocation5] sm:$0xff]
    %v549 = vld [vmem:[#allocation5 + $0x8] sm:$0xff]
    %v550 = vld [vmem:[#allocation5 + $0x10] sm:$0xff]
    %v551 = vld [vmem:[#allocation5 + $0x18] sm:$0xff]
    %v552 = vld [vmem:[#allocation5 + $0x20] sm:$0xff]
    %v553 = vld [vmem:[#allocation5 + $0x28] sm:$0xff]
    %v554 = vld [vmem:[#allocation5 + $0x30] sm:$0xff]
    %v555 = vld [vmem:[#allocation5 + $0x38] sm:$0xff]
    %v556 = vld [vmem:[#allocation5 + $0x40] sm:$0xff]
    %v557 = vld [vmem:[#allocation5 + $0x48] sm:$0xff]
    %v558 = vld [vmem:[#allocation5 + $0x50] sm:$0xff]
    %v559 = vld [vmem:[#allocation5 + $0x58] sm:$0xff]
    %v560 = vld [vmem:[#allocation5 + $0x60] sm:$0xff]
    %v561 = vld [vmem:[#allocation5 + $0x68] sm:$0xff]
    %v562 = vld [vmem:[#allocation5 + $0x70] sm:$0xff]
    %v563 = vld [vmem:[#allocation5 + $0x78] sm:$0xff]
    %v564 = vld [vmem:[%s4] sm:$0x3]
    %v566 = vlaneseq
    %v567 = vshrl.u32 %v566, 7
    %v568 = vsub.s32 0, %v567
    %v569 = vrot.slane %v564, %v568
    %v570 = vlaneseq
    %v571 = vshrl.u32 %v570, 7
    %v572 = vsub.s32 1, %v571
    %v573 = vrot.slane %v564, %v572
    %v592 = vunpack.c.l.b16 %v548
    %v593 = vunpack.c.h.b16 %v548
    %v594 = vunpack.c.l.b16 %v549
    %v595 = vunpack.c.h.b16 %v549
    %v596 = vunpack.c.l.b16 %v550
    %v597 = vunpack.c.h.b16 %v550
    %v598 = vunpack.c.l.b16 %v551
    %v599 = vunpack.c.h.b16 %v551
    %v600 = vunpack.c.l.b16 %v552
    %v601 = vunpack.c.h.b16 %v552
    %v602 = vunpack.c.l.b16 %v553
    %v603 = vunpack.c.h.b16 %v553
    %v604 = vunpack.c.l.b16 %v554
    %v605 = vunpack.c.h.b16 %v554
    %v606 = vunpack.c.l.b16 %v555
    %v607 = vunpack.c.h.b16 %v555
    %v608 = vunpack.c.l.b16 %v556
    %v609 = vunpack.c.h.b16 %v556
    %v610 = vunpack.c.l.b16 %v557
    %v611 = vunpack.c.h.b16 %v557
    %v612 = vunpack.c.l.b16 %v558
    %v613 = vunpack.c.h.b16 %v558
    %v614 = vunpack.c.l.b16 %v559
    %v615 = vunpack.c.h.b16 %v559
    %v616 = vunpack.c.l.b16 %v560
    %v617 = vunpack.c.h.b16 %v560
    %v618 = vunpack.c.l.b16 %v561
    %v619 = vunpack.c.h.b16 %v561
    %v620 = vunpack.c.l.b16 %v562
    %v621 = vunpack.c.h.b16 %v562
    %v622 = vunpack.c.l.b16 %v563
    %v623 = vunpack.c.h.b16 %v563
    %v624 = vpack.c.b16 %v594, %v592
    %v625 = vpack.c.b16 %v595, %v593
    %v626 = vpack.c.b16 %v598, %v596
    %v627 = vpack.c.b16 %v599, %v597
    %v628 = vpack.c.b16 %v602, %v600
    %v629 = vpack.c.b16 %v603, %v601
    %v630 = vpack.c.b16 %v606, %v604
    %v631 = vpack.c.b16 %v607, %v605
    %v632 = vpack.c.b16 %v610, %v608
    %v633 = vpack.c.b16 %v611, %v609
    %v634 = vpack.c.b16 %v614, %v612
    %v635 = vpack.c.b16 %v615, %v613
    %v636 = vpack.c.b16 %v618, %v616
    %v637 = vpack.c.b16 %v619, %v617
    %v638 = vpack.c.b16 %v622, %v620
    %v639 = vpack.c.b16 %v623, %v621
    %656 = vmatprep.subr.bf16.mxu0 %v625
    %657 = vmatpush1.bf16.msra.mxu0 %v624
    %658 = vmatprep.subr.bf16.mxu0 %v627
    %659 = vmatpush1.bf16.msra.mxu0 %v626
    %660 = vmatprep.subr.bf16.mxu0 %v629
    %661 = vmatpush1.bf16.msra.mxu0 %v628
    %662 = vmatprep.subr.bf16.mxu0 %v631
    %663 = vmatpush1.bf16.msra.mxu0 %v630
    %664 = vmatprep.subr.bf16.mxu0 %v633
    %665 = vmatpush1.bf16.msra.mxu0 %v632
    %666 = vmatprep.subr.bf16.mxu0 %v635
    %667 = vmatpush1.bf16.msra.mxu0 %v634
    %668 = vmatprep.subr.bf16.mxu0 %v637
    %669 = vmatpush1.bf16.msra.mxu0 %v636
    %670 = vmatprep.subr.bf16.mxu0 %v639
    %671 = vmatpush1.bf16.msra.mxu0 %v638
    %672 = vmatprep.subr.bf16.mxu0 0
    %673 = vmatpush1.bf16.msra.mxu0 0
    %674 = vmatprep.subr.bf16.mxu0 0
    %675 = vmatpush1.bf16.msra.mxu0 0
    %676 = vmatprep.subr.bf16.mxu0 0
    %677 = vmatpush1.bf16.msra.mxu0 0
    %678 = vmatprep.subr.bf16.mxu0 0
    %679 = vmatpush1.bf16.msra.mxu0 0
    %680 = vmatprep.subr.bf16.mxu0 0
    %681 = vmatpush1.bf16.msra.mxu0 0
    %682 = vmatprep.subr.bf16.mxu0 0
    %683 = vmatpush1.bf16.msra.mxu0 0
    %684 = vmatprep.subr.bf16.mxu0 0
    %685 = vmatpush1.bf16.msra.mxu0 0
    %686 = vmatprep.subr.bf16.mxu0 0
    %687 = vmatpush1.bf16.msra.mxu0 0
    %688 = vmatprep.mubr.bf16.mxu0 0
    %689 = vmatmul.mubr.bf16.gmra.mrb[0].mxu0 %v532
    %v690 = vpop.f32.mrb[0].mxu0
    %v691 = vadd.f32 %v569, %v690
    %v692 = vpop.f32.mrb[0].mxu0
    %v693 = vadd.f32 %v573, %v692
    %v694 = vpop.f32.mrb[0].mxu0
    %v695 = vadd.f32 %v569, %v694
    %v696 = vpop.f32.mrb[0].mxu0
    %v697 = vadd.f32 %v573, %v696
    %698 = vmatprep.mubr.bf16.mxu0 0
    %699 = vmatmul.mubr.bf16.gmra.mrb[0].mxu0 %v533
    %v700 = vpop.f32.mrb[0].mxu0
    %v701 = vadd.f32 %v569, %v700
    %v702 = vpop.f32.mrb[0].mxu0
    %v703 = vadd.f32 %v573, %v702
    %v704 = vpop.f32.mrb[0].mxu0
    %v705 = vadd.f32 %v569, %v704
    %v706 = vpop.f32.mrb[0].mxu0
    %v707 = vadd.f32 %v573, %v706
    %708 = vmatprep.mubr.bf16.mxu0 0
    %709 = vmatmul.mubr.bf16.gmra.mrb[0].mxu0 %v534
    %v710 = vpop.f32.mrb[0].mxu0
    %v711 = vadd.f32 %v569, %v710
    %v712 = vpop.f32.mrb[0].mxu0
    %v713 = vadd.f32 %v573, %v712
    %v714 = vpop.f32.mrb[0].mxu0
    %v715 = vadd.f32 %v569, %v714
    %v716 = vpop.f32.mrb[0].mxu0
    %v717 = vadd.f32 %v573, %v716
    %718 = vmatprep.mubr.bf16.mxu0 0
    %719 = vmatmul.mubr.bf16.gmra.mrb[0].mxu0 %v535
    %v720 = vpop.f32.mrb[0].mxu0
    %v721 = vadd.f32 %v569, %v720
    %v722 = vpop.f32.mrb[0].mxu0
    %v723 = vadd.f32 %v573, %v722
    %v724 = vpop.f32.mrb[0].mxu0
    %v725 = vadd.f32 %v569, %v724
    %v726 = vpop.f32.mrb[0].mxu0
    %v727 = vadd.f32 %v573, %v726
    %728 = vmatprep.mubr.bf16.mxu0 0
    %729 = vmatmul.mubr.bf16.gmra.mrb[0].mxu0 %v536
    %v730 = vpop.f32.mrb[0].mxu0
    %v731 = vadd.f32 %v569, %v730
    %v732 = vpop.f32.mrb[0].mxu0
    %v733 = vadd.f32 %v573, %v732
    %v734 = vpop.f32.mrb[0].mxu0
    %v735 = vadd.f32 %v569, %v734
    %v736 = vpop.f32.mrb[0].mxu0
    %v737 = vadd.f32 %v573, %v736
    %738 = vmatprep.mubr.bf16.mxu0 0
    %739 = vmatmul.mubr.bf16.gmra.mrb[0].mxu0 %v537
    %v740 = vpop.f32.mrb[0].mxu0
    %v741 = vadd.f32 %v569, %v740
    %v742 = vpop.f32.mrb[0].mxu0
    %v743 = vadd.f32 %v573, %v742
    %v744 = vpop.f32.mrb[0].mxu0
    %v745 = vadd.f32 %v569, %v744
    %v746 = vpop.f32.mrb[0].mxu0
    %v747 = vadd.f32 %v573, %v746
    %748 = vmatprep.mubr.bf16.mxu0 0
    %749 = vmatmul.mubr.bf16.gmra.mrb[0].mxu0 %v538
    %v750 = vpop.f32.mrb[0].mxu0
    %v751 = vadd.f32 %v569, %v750
    %v752 = vpop.f32.mrb[0].mxu0
    %v753 = vadd.f32 %v573, %v752
    %v754 = vpop.f32.mrb[0].mxu0
    %v755 = vadd.f32 %v569, %v754
    %v756 = vpop.f32.mrb[0].mxu0
    %v757 = vadd.f32 %v573, %v756
    %758 = vmatprep.mubr.bf16.mxu0 0
    %759 = vmatmul.mubr.bf16.gmra.mrb[0].mxu0 %v539
    %v760 = vpop.f32.mrb[0].mxu0
    %v761 = vadd.f32 %v569, %v760
    %v762 = vpop.f32.mrb[0].mxu0
    %v763 = vadd.f32 %v573, %v762
    %v764 = vpop.f32.mrb[0].mxu0
    %v765 = vadd.f32 %v569, %v764
    %v766 = vpop.f32.mrb[0].mxu0
    %v767 = vadd.f32 %v573, %v766
    %768 = vmatprep.mubr.bf16.mxu0 0
    %769 = vmatmul.mubr.bf16.gmra.mrb[0].mxu0 %v540
    %v770 = vpop.f32.mrb[0].mxu0
    %v771 = vadd.f32 %v569, %v770
    %v772 = vpop.f32.mrb[0].mxu0
    %v773 = vadd.f32 %v573, %v772
    %v774 = vpop.f32.mrb[0].mxu0
    %v775 = vadd.f32 %v569, %v774
    %v776 = vpop.f32.mrb[0].mxu0
    %v777 = vadd.f32 %v573, %v776
    %778 = vmatprep.mubr.bf16.mxu0 0
    %779 = vmatmul.mubr.bf16.gmra.mrb[0].mxu0 %v541
    %v780 = vpop.f32.mrb[0].mxu0
    %v781 = vadd.f32 %v569, %v780
    %v782 = vpop.f32.mrb[0].mxu0
    %v783 = vadd.f32 %v573, %v782
    %v784 = vpop.f32.mrb[0].mxu0
    %v785 = vadd.f32 %v569, %v784
    %v786 = vpop.f32.mrb[0].mxu0
    %v787 = vadd.f32 %v573, %v786
    %788 = vmatprep.mubr.bf16.mxu0 0
    %789 = vmatmul.mubr.bf16.gmra.mrb[0].mxu0 %v542
    %v790 = vpop.f32.mrb[0].mxu0
    %v791 = vadd.f32 %v569, %v790
    %v792 = vpop.f32.mrb[0].mxu0
    %v793 = vadd.f32 %v573, %v792
    %v794 = vpop.f32.mrb[0].mxu0
    %v795 = vadd.f32 %v569, %v794
    %v796 = vpop.f32.mrb[0].mxu0
    %v797 = vadd.f32 %v573, %v796
    %798 = vmatprep.mubr.bf16.mxu0 0
    %799 = vmatmul.mubr.bf16.gmra.mrb[0].mxu0 %v543
    %v800 = vpop.f32.mrb[0].mxu0
    %v801 = vadd.f32 %v569, %v800
    %v802 = vpop.f32.mrb[0].mxu0
    %v803 = vadd.f32 %v573, %v802
    %v804 = vpop.f32.mrb[0].mxu0
    %v805 = vadd.f32 %v569, %v804
    %v806 = vpop.f32.mrb[0].mxu0
    %v807 = vadd.f32 %v573, %v806
    %808 = vmatprep.mubr.bf16.mxu0 0
    %809 = vmatmul.mubr.bf16.gmra.mrb[0].mxu0 %v544
    %v810 = vpop.f32.mrb[0].mxu0
    %v811 = vadd.f32 %v569, %v810
    %v812 = vpop.f32.mrb[0].mxu0
    %v813 = vadd.f32 %v573, %v812
    %v814 = vpop.f32.mrb[0].mxu0
    %v815 = vadd.f32 %v569, %v814
    %v816 = vpop.f32.mrb[0].mxu0
    %v817 = vadd.f32 %v573, %v816
    %818 = vmatprep.mubr.bf16.mxu0 0
    %819 = vmatmul.mubr.bf16.gmra.mrb[0].mxu0 %v545
    %v820 = vpop.f32.mrb[0].mxu0
    %v821 = vadd.f32 %v569, %v820
    %v822 = vpop.f32.mrb[0].mxu0
    %v823 = vadd.f32 %v573, %v822
    %v824 = vpop.f32.mrb[0].mxu0
    %v825 = vadd.f32 %v569, %v824
    %v826 = vpop.f32.mrb[0].mxu0
    %v827 = vadd.f32 %v573, %v826
    %828 = vmatprep.mubr.bf16.mxu0 0
    %829 = vmatmul.mubr.bf16.gmra.mrb[0].mxu0 %v546
    %v830 = vpop.f32.mrb[0].mxu0
    %v831 = vadd.f32 %v569, %v830
    %v832 = vpop.f32.mrb[0].mxu0
    %v833 = vadd.f32 %v573, %v832
    %v834 = vpop.f32.mrb[0].mxu0
    %v835 = vadd.f32 %v569, %v834
    %v836 = vpop.f32.mrb[0].mxu0
    %v837 = vadd.f32 %v573, %v836
    %838 = vmatprep.mubr.bf16.mxu0 0
    %839 = vmatmul.mubr.bf16.gmra.mrb[0].mxu0 %v547
    %v840 = vpop.f32.mrb[0].mxu0
    %v841 = vadd.f32 %v569, %v840
    %v842 = vpop.f32.mrb[0].mxu0
    %v843 = vadd.f32 %v573, %v842
    %v844 = vpop.f32.mrb[0].mxu0
    %v845 = vadd.f32 %v569, %v844
    %v846 = vpop.f32.mrb[0].mxu0
    %v847 = vadd.f32 %v573, %v846
    %848 = vdwg.mxu0
    %v849 = vmax.f32 %v691, 0.0
    %v850 = vmax.f32 %v693, 0.0
    %v851 = vmax.f32 %v695, 0.0
    %v852 = vmax.f32 %v697, 0.0
    %v853 = vmax.f32 %v701, 0.0
    %v854 = vmax.f32 %v703, 0.0
    %v855 = vmax.f32 %v705, 0.0
    %v856 = vmax.f32 %v707, 0.0
    %v857 = vmax.f32 %v711, 0.0
    %v858 = vmax.f32 %v713, 0.0
    %v859 = vmax.f32 %v715, 0.0
    %v860 = vmax.f32 %v717, 0.0
    %v861 = vmax.f32 %v721, 0.0
    %v862 = vmax.f32 %v723, 0.0
    %v863 = vmax.f32 %v725, 0.0
    %v864 = vmax.f32 %v727, 0.0
    %v865 = vmax.f32 %v731, 0.0
    %v866 = vmax.f32 %v733, 0.0
    %v867 = vmax.f32 %v735, 0.0
    %v868 = vmax.f32 %v737, 0.0
    %v869 = vmax.f32 %v741, 0.0
    %v870 = vmax.f32 %v743, 0.0
    %v871 = vmax.f32 %v745, 0.0
    %v872 = vmax.f32 %v747, 0.0
    %v873 = vmax.f32 %v751, 0.0
    %v874 = vmax.f32 %v753, 0.0
    %v875 = vmax.f32 %v755, 0.0
    %v876 = vmax.f32 %v757, 0.0
    %v877 = vmax.f32 %v761, 0.0
    %v878 = vmax.f32 %v763, 0.0
    %v879 = vmax.f32 %v765, 0.0
    %v880 = vmax.f32 %v767, 0.0
    %v881 = vmax.f32 %v771, 0.0
    %v882 = vmax.f32 %v773, 0.0
    %v883 = vmax.f32 %v775, 0.0
    %v884 = vmax.f32 %v777, 0.0
    %v885 = vmax.f32 %v781, 0.0
    %v886 = vmax.f32 %v783, 0.0
    %v887 = vmax.f32 %v785, 0.0
    %v888 = vmax.f32 %v787, 0.0
    %v889 = vmax.f32 %v791, 0.0
    %v890 = vmax.f32 %v793, 0.0
    %v891 = vmax.f32 %v795, 0.0
    %v892 = vmax.f32 %v797, 0.0
    %v893 = vmax.f32 %v801, 0.0
    %v894 = vmax.f32 %v803, 0.0
    %v895 = vmax.f32 %v805, 0.0
    %v896 = vmax.f32 %v807, 0.0
    %v897 = vmax.f32 %v811, 0.0
    %v898 = vmax.f32 %v813, 0.0
    %v899 = vmax.f32 %v815, 0.0
    %v900 = vmax.f32 %v817, 0.0
    %v901 = vmax.f32 %v821, 0.0
    %v902 = vmax.f32 %v823, 0.0
    %v903 = vmax.f32 %v825, 0.0
    %v904 = vmax.f32 %v827, 0.0
    %v905 = vmax.f32 %v831, 0.0
    %v906 = vmax.f32 %v833, 0.0
    %v907 = vmax.f32 %v835, 0.0
    %v908 = vmax.f32 %v837, 0.0
    %v909 = vmax.f32 %v841, 0.0
    %v910 = vmax.f32 %v843, 0.0
    %v911 = vmax.f32 %v845, 0.0
    %v912 = vmax.f32 %v847, 0.0
    %v913 = vpack.c.bf16 %v851, %v849
    %v914 = vpack.c.bf16 %v852, %v850
    %v915 = vpack.c.bf16 %v855, %v853
    %v916 = vpack.c.bf16 %v856, %v854
    %v917 = vpack.c.bf16 %v859, %v857
    %v918 = vpack.c.bf16 %v860, %v858
    %v919 = vpack.c.bf16 %v863, %v861
    %v920 = vpack.c.bf16 %v864, %v862
    %v921 = vpack.c.bf16 %v867, %v865
    %v922 = vpack.c.bf16 %v868, %v866
    %v923 = vpack.c.bf16 %v871, %v869
    %v924 = vpack.c.bf16 %v872, %v870
    %v925 = vpack.c.bf16 %v875, %v873
    %v926 = vpack.c.bf16 %v876, %v874
    %v927 = vpack.c.bf16 %v879, %v877
    %v928 = vpack.c.bf16 %v880, %v878
    %v929 = vpack.c.bf16 %v883, %v881
    %v930 = vpack.c.bf16 %v884, %v882
    %v931 = vpack.c.bf16 %v887, %v885
    %v932 = vpack.c.bf16 %v888, %v886
    %v933 = vpack.c.bf16 %v891, %v889
    %v934 = vpack.c.bf16 %v892, %v890
    %v935 = vpack.c.bf16 %v895, %v893
    %v936 = vpack.c.bf16 %v896, %v894
    %v937 = vpack.c.bf16 %v899, %v897
    %v938 = vpack.c.bf16 %v900, %v898
    %v939 = vpack.c.bf16 %v903, %v901
    %v940 = vpack.c.bf16 %v904, %v902
    %v941 = vpack.c.bf16 %v907, %v905
    %v942 = vpack.c.bf16 %v908, %v906
    %v943 = vpack.c.bf16 %v911, %v909
    %v944 = vpack.c.bf16 %v912, %v910
    %v945 = vld [vmem:[#allocation7] sm:$0xf]
    %v946 = vld [vmem:[#allocation7 + $0x4] sm:$0xf]
    %v947 = vld [vmem:[#allocation7 + $0x8] sm:$0xf]
    %v948 = vld [vmem:[#allocation7 + $0xc] sm:$0xf]
    %v949 = vld [vmem:[#allocation7 + $0x10] sm:$0xf]
    %v950 = vld [vmem:[#allocation7 + $0x14] sm:$0xf]
    %v951 = vld [vmem:[#allocation7 + $0x18] sm:$0xf]
    %v952 = vld [vmem:[#allocation7 + $0x1c] sm:$0xf]
    %v953 = vld [vmem:[#allocation7 + $0x20] sm:$0xf]
    %v954 = vld [vmem:[#allocation7 + $0x24] sm:$0xf]
    %v955 = vld [vmem:[#allocation7 + $0x28] sm:$0xf]
    %v956 = vld [vmem:[#allocation7 + $0x2c] sm:$0xf]
    %v957 = vld [vmem:[#allocation7 + $0x30] sm:$0xf]
    %v958 = vld [vmem:[#allocation7 + $0x34] sm:$0xf]
    %v959 = vld [vmem:[#allocation7 + $0x38] sm:$0xf]
    %v960 = vld [vmem:[#allocation7 + $0x3c] sm:$0xf]
    %v961 = vld [vmem:[#allocation7 + $0x40] sm:$0xf]
    %v962 = vld [vmem:[#allocation7 + $0x44] sm:$0xf]
    %v963 = vld [vmem:[#allocation7 + $0x48] sm:$0xf]
    %v964 = vld [vmem:[#allocation7 + $0x4c] sm:$0xf]
    %v965 = vld [vmem:[#allocation7 + $0x50] sm:$0xf]
    %v966 = vld [vmem:[#allocation7 + $0x54] sm:$0xf]
    %v967 = vld [vmem:[#allocation7 + $0x58] sm:$0xf]
    %v968 = vld [vmem:[#allocation7 + $0x5c] sm:$0xf]
    %v969 = vld [vmem:[#allocation7 + $0x60] sm:$0xf]
    %v970 = vld [vmem:[#allocation7 + $0x64] sm:$0xf]
    %v971 = vld [vmem:[#allocation7 + $0x68] sm:$0xf]
    %v972 = vld [vmem:[#allocation7 + $0x6c] sm:$0xf]
    %v973 = vld [vmem:[#allocation7 + $0x70] sm:$0xf]
    %v974 = vld [vmem:[#allocation7 + $0x74] sm:$0xf]
    %v975 = vld [vmem:[#allocation7 + $0x78] sm:$0xf]
    %v976 = vld [vmem:[#allocation7 + $0x7c] sm:$0xf]
    %v1009 = vunpack.c.l.b16 %v945
    %v1010 = vunpack.c.l.b16 %v946
    %v1011 = vunpack.c.l.b16 %v947
    %v1012 = vunpack.c.l.b16 %v948
    %v1013 = vunpack.c.l.b16 %v949
    %v1014 = vunpack.c.l.b16 %v950
    %v1015 = vunpack.c.l.b16 %v951
    %v1016 = vunpack.c.l.b16 %v952
    %v1017 = vunpack.c.l.b16 %v953
    %v1018 = vunpack.c.l.b16 %v954
    %v1019 = vunpack.c.l.b16 %v955
    %v1020 = vunpack.c.l.b16 %v956
    %v1021 = vunpack.c.l.b16 %v957
    %v1022 = vunpack.c.l.b16 %v958
    %v1023 = vunpack.c.l.b16 %v959
    %v1024 = vunpack.c.l.b16 %v960
    %v1025 = vunpack.c.l.b16 %v961
    %v1026 = vunpack.c.l.b16 %v962
    %v1027 = vunpack.c.l.b16 %v963
    %v1028 = vunpack.c.l.b16 %v964
    %v1029 = vunpack.c.l.b16 %v965
    %v1030 = vunpack.c.l.b16 %v966
    %v1031 = vunpack.c.l.b16 %v967
    %v1032 = vunpack.c.l.b16 %v968
    %v1033 = vunpack.c.l.b16 %v969
    %v1034 = vunpack.c.l.b16 %v970
    %v1035 = vunpack.c.l.b16 %v971
    %v1036 = vunpack.c.l.b16 %v972
    %v1037 = vunpack.c.l.b16 %v973
    %v1038 = vunpack.c.l.b16 %v974
    %v1039 = vunpack.c.l.b16 %v975
    %v1040 = vunpack.c.l.b16 %v976
    %v1041 = vpack.c.b16 %v1010, %v1009
    %v1042 = vpack.c.b16 %v1012, %v1011
    %v1043 = vpack.c.b16 %v1014, %v1013
    %v1044 = vpack.c.b16 %v1016, %v1015
    %v1045 = vpack.c.b16 %v1018, %v1017
    %v1046 = vpack.c.b16 %v1020, %v1019
    %v1047 = vpack.c.b16 %v1022, %v1021
    %v1048 = vpack.c.b16 %v1024, %v1023
    %v1049 = vpack.c.b16 %v1026, %v1025
    %v1050 = vpack.c.b16 %v1028, %v1027
    %v1051 = vpack.c.b16 %v1030, %v1029
    %v1052 = vpack.c.b16 %v1032, %v1031
    %v1053 = vpack.c.b16 %v1034, %v1033
    %v1054 = vpack.c.b16 %v1036, %v1035
    %v1055 = vpack.c.b16 %v1038, %v1037
    %v1056 = vpack.c.b16 %v1040, %v1039
    %1073 = vmatprep.subr.bf16.mxu0 0
    %1074 = vmatpush1.bf16.msra.mxu0 %v1041
    %1075 = vmatprep.subr.bf16.mxu0 0
    %1076 = vmatpush1.bf16.msra.mxu0 %v1042
    %1077 = vmatprep.subr.bf16.mxu0 0
    %1078 = vmatpush1.bf16.msra.mxu0 %v1043
    %1079 = vmatprep.subr.bf16.mxu0 0
    %1080 = vmatpush1.bf16.msra.mxu0 %v1044
    %1081 = vmatprep.subr.bf16.mxu0 0
    %1082 = vmatpush1.bf16.msra.mxu0 %v1045
    %1083 = vmatprep.subr.bf16.mxu0 0
    %1084 = vmatpush1.bf16.msra.mxu0 %v1046
    %1085 = vmatprep.subr.bf16.mxu0 0
    %1086 = vmatpush1.bf16.msra.mxu0 %v1047
    %1087 = vmatprep.subr.bf16.mxu0 0
    %1088 = vmatpush1.bf16.msra.mxu0 %v1048
    %1089 = vmatprep.subr.bf16.mxu0 0
    %1090 = vmatpush1.bf16.msra.mxu0 %v1049
    %1091 = vmatprep.subr.bf16.mxu0 0
    %1092 = vmatpush1.bf16.msra.mxu0 %v1050
    %1093 = vmatprep.subr.bf16.mxu0 0
    %1094 = vmatpush1.bf16.msra.mxu0 %v1051
    %1095 = vmatprep.subr.bf16.mxu0 0
    %1096 = vmatpush1.bf16.msra.mxu0 %v1052
    %1097 = vmatprep.subr.bf16.mxu0 0
    %1098 = vmatpush1.bf16.msra.mxu0 %v1053
    %1099 = vmatprep.subr.bf16.mxu0 0
    %1100 = vmatpush1.bf16.msra.mxu0 %v1054
    %1101 = vmatprep.subr.bf16.mxu0 0
    %1102 = vmatpush1.bf16.msra.mxu0 %v1055
    %1103 = vmatprep.subr.bf16.mxu0 0
    %1104 = vmatpush1.bf16.msra.mxu0 %v1056
    %1105 = vmatprep.mubr.bf16.mxu0 %v914
    %1106 = vmatmul.mubr.bf16.gmra.mrb[0].mxu0 %v913
    %v1107 = vpop.f32.mrb[0].mxu0
    %v1108 = vadd.f32 0.0, %v1107
    %v1109 = vpop.f32.mrb[0].mxu0
    %v1110 = vpop.f32.mrb[0].mxu0
    %v1111 = vadd.f32 0.0, %v1110
    %v1112 = vpop.f32.mrb[0].mxu0
    %1113 = vmatprep.mubr.bf16.mxu0 %v916
    %1114 = vmatmul.mubr.bf16.gmra.mrb[0].mxu0 %v915
    %v1115 = vpop.f32.mrb[0].mxu0
    %v1116 = vadd.f32 0.0, %v1115
    %v1117 = vpop.f32.mrb[0].mxu0
    %v1118 = vpop.f32.mrb[0].mxu0
    %v1119 = vadd.f32 0.0, %v1118
    %v1120 = vpop.f32.mrb[0].mxu0
    %1121 = vmatprep.mubr.bf16.mxu0 %v918
    %1122 = vmatmul.mubr.bf16.gmra.mrb[0].mxu0 %v917
    %v1123 = vpop.f32.mrb[0].mxu0
    %v1124 = vadd.f32 0.0, %v1123
    %v1125 = vpop.f32.mrb[0].mxu0
    %v1126 = vpop.f32.mrb[0].mxu0
    %v1127 = vadd.f32 0.0, %v1126
    %v1128 = vpop.f32.mrb[0].mxu0
    %1129 = vmatprep.mubr.bf16.mxu0 %v920
    %1130 = vmatmul.mubr.bf16.gmra.mrb[0].mxu0 %v919
    %v1131 = vpop.f32.mrb[0].mxu0
    %v1132 = vadd.f32 0.0, %v1131
    %v1133 = vpop.f32.mrb[0].mxu0
    %v1134 = vpop.f32.mrb[0].mxu0
    %v1135 = vadd.f32 0.0, %v1134
    %v1136 = vpop.f32.mrb[0].mxu0
    %1137 = vmatprep.mubr.bf16.mxu0 %v922
    %1138 = vmatmul.mubr.bf16.gmra.mrb[0].mxu0 %v921
    %v1139 = vpop.f32.mrb[0].mxu0
    %v1140 = vadd.f32 0.0, %v1139
    %v1141 = vpop.f32.mrb[0].mxu0
    %v1142 = vpop.f32.mrb[0].mxu0
    %v1143 = vadd.f32 0.0, %v1142
    %v1144 = vpop.f32.mrb[0].mxu0
    %1145 = vmatprep.mubr.bf16.mxu0 %v924
    %1146 = vmatmul.mubr.bf16.gmra.mrb[0].mxu0 %v923
    %v1147 = vpop.f32.mrb[0].mxu0
    %v1148 = vadd.f32 0.0, %v1147
    %v1149 = vpop.f32.mrb[0].mxu0
    %v1150 = vpop.f32.mrb[0].mxu0
    %v1151 = vadd.f32 0.0, %v1150
    %v1152 = vpop.f32.mrb[0].mxu0
    %1153 = vmatprep.mubr.bf16.mxu0 %v926
    %1154 = vmatmul.mubr.bf16.gmra.mrb[0].mxu0 %v925
    %v1155 = vpop.f32.mrb[0].mxu0
    %v1156 = vadd.f32 0.0, %v1155
    %v1157 = vpop.f32.mrb[0].mxu0
    %v1158 = vpop.f32.mrb[0].mxu0
    %v1159 = vadd.f32 0.0, %v1158
    %v1160 = vpop.f32.mrb[0].mxu0
    %1161 = vmatprep.mubr.bf16.mxu0 %v928
    %1162 = vmatmul.mubr.bf16.gmra.mrb[0].mxu0 %v927
    %v1163 = vpop.f32.mrb[0].mxu0
    %v1164 = vadd.f32 0.0, %v1163
    %v1165 = vpop.f32.mrb[0].mxu0
    %v1166 = vpop.f32.mrb[0].mxu0
    %v1167 = vadd.f32 0.0, %v1166
    %v1168 = vpop.f32.mrb[0].mxu0
    %1169 = vmatprep.mubr.bf16.mxu0 %v930
    %1170 = vmatmul.mubr.bf16.gmra.mrb[0].mxu0 %v929
    %v1171 = vpop.f32.mrb[0].mxu0
    %v1172 = vadd.f32 0.0, %v1171
    %v1173 = vpop.f32.mrb[0].mxu0
    %v1174 = vpop.f32.mrb[0].mxu0
    %v1175 = vadd.f32 0.0, %v1174
    %v1176 = vpop.f32.mrb[0].mxu0
    %1177 = vmatprep.mubr.bf16.mxu0 %v932
    %1178 = vmatmul.mubr.bf16.gmra.mrb[0].mxu0 %v931
    %v1179 = vpop.f32.mrb[0].mxu0
    %v1180 = vadd.f32 0.0, %v1179
    %v1181 = vpop.f32.mrb[0].mxu0
    %v1182 = vpop.f32.mrb[0].mxu0
    %v1183 = vadd.f32 0.0, %v1182
    %v1184 = vpop.f32.mrb[0].mxu0
    %1185 = vmatprep.mubr.bf16.mxu0 %v934
    %1186 = vmatmul.mubr.bf16.gmra.mrb[0].mxu0 %v933
    %v1187 = vpop.f32.mrb[0].mxu0
    %v1188 = vadd.f32 0.0, %v1187
    %v1189 = vpop.f32.mrb[0].mxu0
    %v1190 = vpop.f32.mrb[0].mxu0
    %v1191 = vadd.f32 0.0, %v1190
    %v1192 = vpop.f32.mrb[0].mxu0
    %1193 = vmatprep.mubr.bf16.mxu0 %v936
    %1194 = vmatmul.mubr.bf16.gmra.mrb[0].mxu0 %v935
    %v1195 = vpop.f32.mrb[0].mxu0
    %v1196 = vadd.f32 0.0, %v1195
    %v1197 = vpop.f32.mrb[0].mxu0
    %v1198 = vpop.f32.mrb[0].mxu0
    %v1199 = vadd.f32 0.0, %v1198
    %v1200 = vpop.f32.mrb[0].mxu0
    %1201 = vmatprep.mubr.bf16.mxu0 %v938
    %1202 = vmatmul.mubr.bf16.gmra.mrb[0].mxu0 %v937
    %v1203 = vpop.f32.mrb[0].mxu0
    %v1204 = vadd.f32 0.0, %v1203
    %v1205 = vpop.f32.mrb[0].mxu0
    %v1206 = vpop.f32.mrb[0].mxu0
    %v1207 = vadd.f32 0.0, %v1206
    %v1208 = vpop.f32.mrb[0].mxu0
    %1209 = vmatprep.mubr.bf16.mxu0 %v940
    %1210 = vmatmul.mubr.bf16.gmra.mrb[0].mxu0 %v939
    %v1211 = vpop.f32.mrb[0].mxu0
    %v1212 = vadd.f32 0.0, %v1211
    %v1213 = vpop.f32.mrb[0].mxu0
    %v1214 = vpop.f32.mrb[0].mxu0
    %v1215 = vadd.f32 0.0, %v1214
    %v1216 = vpop.f32.mrb[0].mxu0
    %1217 = vmatprep.mubr.bf16.mxu0 %v942
    %1218 = vmatmul.mubr.bf16.gmra.mrb[0].mxu0 %v941
    %v1219 = vpop.f32.mrb[0].mxu0
    %v1220 = vadd.f32 0.0, %v1219
    %v1221 = vpop.f32.mrb[0].mxu0
    %v1222 = vpop.f32.mrb[0].mxu0
    %v1223 = vadd.f32 0.0, %v1222
    %v1224 = vpop.f32.mrb[0].mxu0
    %1225 = vmatprep.mubr.bf16.mxu0 %v944
    %1226 = vmatmul.mubr.bf16.gmra.mrb[0].mxu0 %v943
    %v1227 = vpop.f32.mrb[0].mxu0
    %v1228 = vadd.f32 0.0, %v1227
    %v1229 = vpop.f32.mrb[0].mxu0
    %v1230 = vpop.f32.mrb[0].mxu0
    %v1231 = vadd.f32 0.0, %v1230
    %v1232 = vpop.f32.mrb[0].mxu0
    %1233 = vdwg.mxu0
    %v1234 = vadd.f32 %v69, %v1108
    %v1235 = vadd.f32 %v70, %v1111
    %v1236 = vadd.f32 %v71, %v1116
    %v1237 = vadd.f32 %v72, %v1119
    %v1238 = vadd.f32 %v73, %v1124
    %v1239 = vadd.f32 %v74, %v1127
    %v1240 = vadd.f32 %v75, %v1132
    %v1241 = vadd.f32 %v76, %v1135
    %v1242 = vadd.f32 %v77, %v1140
    %v1243 = vadd.f32 %v78, %v1143
    %v1244 = vadd.f32 %v79, %v1148
    %v1245 = vadd.f32 %v80, %v1151
    %v1246 = vadd.f32 %v81, %v1156
    %v1247 = vadd.f32 %v82, %v1159
    %v1248 = vadd.f32 %v83, %v1164
    %v1249 = vadd.f32 %v84, %v1167
    %v1250 = vadd.f32 %v85, %v1172
    %v1251 = vadd.f32 %v86, %v1175
    %v1252 = vadd.f32 %v87, %v1180
    %v1253 = vadd.f32 %v88, %v1183
    %v1254 = vadd.f32 %v89, %v1188
    %v1255 = vadd.f32 %v90, %v1191
    %v1256 = vadd.f32 %v91, %v1196
    %v1257 = vadd.f32 %v92, %v1199
    %v1258 = vadd.f32 %v93, %v1204
    %v1259 = vadd.f32 %v94, %v1207
    %v1260 = vadd.f32 %v95, %v1212
    %v1261 = vadd.f32 %v96, %v1215
    %v1262 = vadd.f32 %v97, %v1220
    %v1263 = vadd.f32 %v98, %v1223
    %v1264 = vadd.f32 %v99, %v1228
    %v1265 = vadd.f32 %v100, %v1231
    %v1266 = vld [vmem:[%s6] sm:$0x1]
    %v1268 = vlaneseq
    %v1269 = vshrl.u32 %v1268, 7
    %v1270 = vsub.s32 0, %v1269
    %v1271 = vrot.slane %v1266, %v1270
    %v1273 = vadd.f32 %v1234, %v1271
    %v1274 = vadd.f32 %v1235, %v1271
    %v1275 = vadd.f32 %v1236, %v1271
    %v1276 = vadd.f32 %v1237, %v1271
    %v1277 = vadd.f32 %v1238, %v1271
    %v1278 = vadd.f32 %v1239, %v1271
    %v1279 = vadd.f32 %v1240, %v1271
    %v1280 = vadd.f32 %v1241, %v1271
    %v1281 = vadd.f32 %v1242, %v1271
    %v1282 = vadd.f32 %v1243, %v1271
    %v1283 = vadd.f32 %v1244, %v1271
    %v1284 = vadd.f32 %v1245, %v1271
    %v1285 = vadd.f32 %v1246, %v1271
    %v1286 = vadd.f32 %v1247, %v1271
    %v1287 = vadd.f32 %v1248, %v1271
    %v1288 = vadd.f32 %v1249, %v1271
    %v1289 = vadd.f32 %v1250, %v1271
    %v1290 = vadd.f32 %v1251, %v1271
    %v1291 = vadd.f32 %v1252, %v1271
    %v1292 = vadd.f32 %v1253, %v1271
    %v1293 = vadd.f32 %v1254, %v1271
    %v1294 = vadd.f32 %v1255, %v1271
    %v1295 = vadd.f32 %v1256, %v1271
    %v1296 = vadd.f32 %v1257, %v1271
    %v1297 = vadd.f32 %v1258, %v1271
    %v1298 = vadd.f32 %v1259, %v1271
    %v1299 = vadd.f32 %v1260, %v1271
    %v1300 = vadd.f32 %v1261, %v1271
    %v1301 = vadd.f32 %v1262, %v1271
    %v1302 = vadd.f32 %v1263, %v1271
    %v1303 = vadd.f32 %v1264, %v1271
    %v1304 = vadd.f32 %v1265, %v1271
    %1305 = vst [vmem:[#allocation8] sm:$0xff] %v1273
    %1306 = vst [vmem:[#allocation8 + $0x8] sm:$0xff] %v1274
    %1307 = vst [vmem:[#allocation8 + $0x10] sm:$0xff] %v1275
    %1308 = vst [vmem:[#allocation8 + $0x18] sm:$0xff] %v1276
    %1309 = vst [vmem:[#allocation8 + $0x20] sm:$0xff] %v1277
    %1310 = vst [vmem:[#allocation8 + $0x28] sm:$0xff] %v1278
    %1311 = vst [vmem:[#allocation8 + $0x30] sm:$0xff] %v1279
    %1312 = vst [vmem:[#allocation8 + $0x38] sm:$0xff] %v1280
    %1313 = vst [vmem:[#allocation8 + $0x40] sm:$0xff] %v1281
    %1314 = vst [vmem:[#allocation8 + $0x48] sm:$0xff] %v1282
    %1315 = vst [vmem:[#allocation8 + $0x50] sm:$0xff] %v1283
    %1316 = vst [vmem:[#allocation8 + $0x58] sm:$0xff] %v1284
    %1317 = vst [vmem:[#allocation8 + $0x60] sm:$0xff] %v1285
    %1318 = vst [vmem:[#allocation8 + $0x68] sm:$0xff] %v1286
    %1319 = vst [vmem:[#allocation8 + $0x70] sm:$0xff] %v1287
    %1320 = vst [vmem:[#allocation8 + $0x78] sm:$0xff] %v1288
    %1321 = vst [vmem:[#allocation8 + $0x80] sm:$0xff] %v1289
    %1322 = vst [vmem:[#allocation8 + $0x88] sm:$0xff] %v1290
    %1323 = vst [vmem:[#allocation8 + $0x90] sm:$0xff] %v1291
    %1324 = vst [vmem:[#allocation8 + $0x98] sm:$0xff] %v1292
    %1325 = vst [vmem:[#allocation8 + $0xa0] sm:$0xff] %v1293
    %1326 = vst [vmem:[#allocation8 + $0xa8] sm:$0xff] %v1294
    %1327 = vst [vmem:[#allocation8 + $0xb0] sm:$0xff] %v1295
    %1328 = vst [vmem:[#allocation8 + $0xb8] sm:$0xff] %v1296
    %1329 = vst [vmem:[#allocation8 + $0xc0] sm:$0xff] %v1297
    %1330 = vst [vmem:[#allocation8 + $0xc8] sm:$0xff] %v1298
    %1331 = vst [vmem:[#allocation8 + $0xd0] sm:$0xff] %v1299
    %1332 = vst [vmem:[#allocation8 + $0xd8] sm:$0xff] %v1300
    %1333 = vst [vmem:[#allocation8 + $0xe0] sm:$0xff] %v1301
    %1334 = vst [vmem:[#allocation8 + $0xe8] sm:$0xff] %v1302
    %1335 = vst [vmem:[#allocation8 + $0xf0] sm:$0xff] %v1303
    %1336 = vst [vmem:[#allocation8 + $0xf8] sm:$0xff] %v1304
    // Predicated region
    $region42: #{_ffn_sublayer_impl.1} parent=1 // pred_check
      _
    $region43: #{_ffn_sublayer_impl.1} parent=1 // pred_check_branch
      %1338 = sbr.rel (0) target = $region45
    $region44: #{_ffn_sublayer_impl.1} parent=1 // pred_region
      %s1340 = ssub.s32 4096, 4096
      %1341 = vsyncadd [#allocation4], %s1340
      %s1342 = sshll.u32 [#allocation8], 4
      %s1343 = int_to_ptr.vmem [resolvable:$true] %s1342
      %1348 = dma.vmem_to_hbm [thread:$0]  %s1343, 4096, %s7, [#allocation4], 128, 128, 8
    $region45: #{_ffn_sublayer_impl.1} parent=1 // pred_fallthru
      _
    // Predicated region
    $region46: #{_ffn_sublayer_impl.1} parent=1 // pred_check
      _
    $region47: #{_ffn_sublayer_impl.1} parent=1 // pred_check_branch
      %1350 = sbr.rel (0) target = $region49
    $region48: #{_ffn_sublayer_impl.1} parent=1 // pred_region
      %1351 = dma.done [#allocation4], 4096
    $region49: #{_ffn_sublayer_impl.1} parent=1 // pred_fallthru
      _
    %1352 = vsyncpa [#allocation3], 1
    %1353 = vsyncpa [#allocation6], 1
    %1354 = vsyncpa [#allocation4], 1

</llo_original>
